<compile_context>
chip_gen: v6e
topology: v6e:2x2x1
jax: 0.10.0
libtpu: 0.0.40
codegen_flags: <defaults>
</compile_context>

<pallas_src>
import functools

import jax
import jax.numpy as jnp
from jax import lax
from jax.experimental import pallas as pl
from jax.experimental.pallas import tpu as pltpu

HP = 32            # padded per-direction hidden size (real H = 25)
HP2 = 2 * HP       # merged fwd+bwd hidden width (64)
G4 = 4 * HP2       # merged gate width: [i | f | g | o], each 64 = [fwd 32 | bwd 32]
TAGP = 128         # padded tag lane width (real tag_dim = 2)


def _round_up(x, m):
    return ((x + m - 1) // m) * m


def _mynet_kernel(sent_ref,    # (T*B, 1) int32   time-major token ids (row t*B + b)
                  gtab_ref,    # (VP, G4) f32     gate table: emb @ Wx_merged + bias (row per token)
                  wh_ref,      # (HP2, G4) bf16   block-diagonal merged recurrent weights
                  wt_ref,      # (HP2, TAGP) bf16 fused tag-head weights (fwd rows 0:32, bwd 32:64)
                  bt_ref,      # (1, TAGP) f32    tag bias (-1e30 in padded lanes)
                  out_ref,     # (T*B, TAGP) f32  log-probs (padded lanes ~ -1e30)
                  hs_ref,      # scratch VMEM (T*B, HP2) f32, time-aligned hidden slab
                  *, T, B, VP):
    TB = T * B

    # ---- fused embedding lookup + input projection: one-hot select of the precomputed
    #      gate table (exact selection, f32) -> gx row r holds x_r @ Wx + b for BOTH dirs ----
    ids = sent_ref[...]                                                   # (TB, 1) int32
    onehot = (ids == lax.broadcasted_iota(jnp.int32, (TB, VP), 1)).astype(jnp.float32)
    gx = jnp.dot(onehot, gtab_ref[...], preferred_element_type=jnp.float32)   # (TB, G4)

    wh = wh_ref[...]                                                      # loaded once
    # Static lane mask selecting the forward-direction columns of the interleaved layout.
    fwd_cols = (lax.broadcasted_iota(jnp.int32, (B, G4), 1) % HP2) < HP   # (B, G4) bool

    h = jnp.zeros((B, HP2), jnp.float32)
    c = jnp.zeros((B, HP2), jnp.float32)

    # ---- merged block-diagonal recurrence, fully unrolled (static T) ----
    for s in range(T):
        # fwd half advances time s, bwd half advances time T-1-s
        gx_s = jnp.where(fwd_cols,
                         gx[s * B:(s + 1) * B, :],
                         gx[(T - 1 - s) * B:(T - s) * B, :])
        if s == 0:
            gates = gx_s                      # h = c = 0: skip the useless zero matmul
        else:
            gates = gx_s + jnp.dot(h.astype(jnp.bfloat16), wh,
                                   preferred_element_type=jnp.float32)   # (B, G4)
        sg = jax.nn.sigmoid(gates)
        i_g = sg[:, 0 * HP2:1 * HP2]          # 64-lane-aligned gate slices (fwd|bwd packed)
        f_g = sg[:, 1 * HP2:2 * HP2]
        g_g = jnp.tanh(gates[:, 2 * HP2:3 * HP2])   # tanh only on the g-gate slice
        o_g = sg[:, 3 * HP2:4 * HP2]
        c = f_g * c + i_g * g_g
        h = o_g * jnp.tanh(c)
        # time-aligned hidden slab: fwd half belongs to time s, bwd half to time T-1-s
        hs_ref[s * B:(s + 1) * B, 0:HP] = h[:, 0:HP]
        hs_ref[(T - 1 - s) * B:(T - s) * B, HP:HP2] = h[:, HP:HP2]

    # ---- tag head: ReLU -> single fused Linear -> log_softmax, one lane-dense store ----
    hrelu = jax.nn.relu(hs_ref[...]).astype(jnp.bfloat16)                # (TB, HP2)
    logits = (jnp.dot(hrelu, wt_ref[...], preferred_element_type=jnp.float32)
              + bt_ref[...])                                             # (TB, TAGP); pads ~ -1e30
    m = jnp.max(logits, axis=-1, keepdims=True)
    lse = m + jnp.log(jnp.sum(jnp.exp(logits - m), axis=-1, keepdims=True))
    out_ref[...] = logits - lse               # single (16, 128) lane-dense store


def _prep_kernel_params(emb, fwd, bwd, w_tag, b_tag, H, tag_dim):
    """Pad / fuse PyTorch-layout params into the kernel's lane-aligned merged layout."""
    assert H <= HP and tag_dim <= TAGP
    vocab, E = emb.shape
    VP = _round_up(vocab, 128)

    def col(g, d):                 # start column of gate g (i,f,g,o), direction d (0 fwd, 1 bwd)
        return g * HP2 + d * HP

    wx = jnp.zeros((E, G4), jnp.float32)        # merged input-projection weights
    bg = jnp.zeros((1, G4), jnp.float32)        # merged gate bias
    wh = jnp.zeros((HP2, G4), jnp.float32)      # merged recurrent weights (block-diagonal)
    for d, (w_ih, w_hh, b_ih, b_hh) in enumerate((fwd, bwd)):
        wx_d = w_ih.T                           # (E, 4H), PyTorch gate order i, f, g, o
        wh_d = w_hh.T                           # (H, 4H)
        b_d = b_ih + b_hh
        for g in range(4):
            c0 = col(g, d)
            wx = wx.at[:, c0:c0 + H].set(wx_d[:, g * H:(g + 1) * H])
            wh = wh.at[d * HP:d * HP + H, c0:c0 + H].set(wh_d[:, g * H:(g + 1) * H])
            bg = bg.at[0, c0:c0 + H].set(b_d[g * H:(g + 1) * H])

    # Fold embedding + input projection + bias into one gate table (exact f32, done once).
    gtab = jnp.zeros((VP, G4), jnp.float32).at[:vocab, :].set(emb @ wx + bg)

    # Fused tag head: rows 0:H act on the forward hidden half, rows HP:HP+H on the backward half.
    wt = jnp.zeros((HP2, TAGP), jnp.float32)
    wt = wt.at[:H, :tag_dim].set(w_tag[:, :H].T)
    wt = wt.at[HP:HP + H, :tag_dim].set(w_tag[:, H:].T)
    # Padded tag lanes get a huge negative (finite) bias so they vanish from the softmax sum.
    bt = jnp.full((1, TAGP), -1e30, jnp.float32).at[0, :tag_dim].set(b_tag)

    # --- zero-padding invariants: padded gate columns / hidden rows must be exactly 0 so the
    #     padded hidden lanes stay 0 through the recurrence (sigmoid(0)=0.5 never leaks). ---
    if H < HP:
        pad_cols = jnp.array([cc for g in range(4) for d in range(2)
                              for cc in range(col(g, d) + H, col(g, d) + HP)], jnp.int32)
        assert float(jnp.max(jnp.abs(gtab[:, pad_cols]))) == 0.0
        assert float(jnp.max(jnp.abs(bg[:, pad_cols]))) == 0.0
        assert float(jnp.max(jnp.abs(wh[:, pad_cols]))) == 0.0
        assert float(jnp.max(jnp.abs(wh[H:HP, :]))) == 0.0
        assert float(jnp.max(jnp.abs(wh[HP + H:, :]))) == 0.0

    return {"gtab": gtab,
            "wh": wh.astype(jnp.bfloat16),
            "wt": wt.astype(jnp.bfloat16),
            "bt": bt,
            "vocab_pad": VP}


def mynet_forward(sentence, sentence_lens, params, tags=None):
    """Mirrors MyNet.forward. sentence: (B, T) int32. Returns (log_probs (B,T,tag), None)."""
    del sentence_lens   # the PyTorch forward ignores it too (no pack_padded_sequence)
    B, T = sentence.shape
    kp = params["kernel"]
    VP = kp["vocab_pad"]

    # Only remaining host-side glue: flatten token ids to time-major (row t*B + b), 64 bytes.
    sent_tm = jnp.transpose(sentence).reshape(T * B, 1).astype(jnp.int32)

    vmem = pl.BlockSpec(memory_space=pltpu.MemorySpace.VMEM)
    out = pl.pallas_call(
        functools.partial(_mynet_kernel, T=T, B=B, VP=VP),
        out_shape=jax.ShapeDtypeStruct((T * B, TAGP), jnp.float32),
        in_specs=[vmem] * 5,
        out_specs=vmem,
        scratch_shapes=[pltpu.VMEM((T * B, HP2), jnp.float32)],
    )(sent_tm, kp["gtab"], kp["wh"], kp["wt"], kp["bt"])

    tag_dim = params["tag_dim"]
    tag_scores = jnp.transpose(out.reshape(T, B, TAGP)[:, :, :tag_dim], (1, 0, 2))
    # TODO(synk): CrossEntropyLoss branch (tags is not None) not implemented in-kernel.
    return tag_scores, None


def init_params(vocab_size, embedding_dim=30, hidden_dim=50, tag_dim=2, seed=0):
    """Deterministic synthetic parameters matching MyNet's shapes (PyTorch-style init)."""
    H = hidden_dim // 2                       # per-direction hidden = 25
    key = jax.random.PRNGKey(seed)
    ks = jax.random.split(key, 11)

    def u(k, shape, bound):
        return jax.random.uniform(k, shape, jnp.float32, -bound, bound)

    s_lstm = 1.0 / (H ** 0.5)
    s_lin = 1.0 / (hidden_dim ** 0.5)

    emb = jax.random.normal(ks[0], (vocab_size, embedding_dim), jnp.float32)

    def lstm_dir(ka, kb, kc, kd):
        # PyTorch layout: W_ih (4H, E), W_hh (4H, H), gate order [i, f, g, o].
        return (u(ka, (4 * H, embedding_dim), s_lstm),
                u(kb, (4 * H, H), s_lstm),
                u(kc, (4 * H,), s_lstm),
                u(kd, (4 * H,), s_lstm))

    fwd = lstm_dir(ks[1], ks[2], ks[3], ks[4])
    bwd = lstm_dir(ks[5], ks[6], ks[7], ks[8])
    w_tag = u(ks[9], (tag_dim, hidden_dim), s_lin)     # Linear(2H -> tag_dim)
    b_tag = u(ks[10], (tag_dim,), s_lin)

    return {"kernel": _prep_kernel_params(emb, fwd, bwd, w_tag, b_tag, H, tag_dim),
            "raw": {"embedding": emb, "fwd": fwd, "bwd": bwd,
                    "w_tag": w_tag, "b_tag": b_tag},
            "hidden_per_dir": H, "tag_dim": tag_dim}


def _reference_forward(sentence, params):
    """Pure-JAX f32 reference replicating the PyTorch module (validation only)."""
    H = params["hidden_per_dir"]
    w_tag, b_tag = params["raw"]["w_tag"], params["raw"]["b_tag"]
    x = jnp.transpose(params["raw"]["embedding"][sentence], (1, 0, 2))   # (T, B, E)
    _, B, _ = x.shape

    def run_dir(w_ih, w_hh, b_ih, b_hh, reverse):
        def step(carry, x_t):
            h, c = carry
            g = x_t @ w_ih.T + h @ w_hh.T + b_ih + b_hh
            i = jax.nn.sigmoid(g[:, 0 * H:1 * H])
            f = jax.nn.sigmoid(g[:, 1 * H:2 * H])
            gg = jnp.tanh(g[:, 2 * H:3 * H])
            o = jax.nn.sigmoid(g[:, 3 * H:4 * H])
            c = f * c + i * gg
            h = o * jnp.tanh(c)
            return (h, c), h
        init = (jnp.zeros((B, H), jnp.float32), jnp.zeros((B, H), jnp.float32))
        _, hs = lax.scan(step, init, x, reverse=reverse)
        return hs                                                  # (T, B, H)

    hf = run_dir(*params["raw"]["fwd"], reverse=False)
    hb = run_dir(*params["raw"]["bwd"], reverse=True)
    logits = jax.nn.relu(jnp.concatenate([hf, hb], axis=-1)) @ w_tag.T + b_tag
    return jnp.transpose(jax.nn.log_softmax(logits, axis=-1), (1, 0, 2))


if __name__ == "__main__":
    vocab_size, B, T = 20, 2, 8
    params = init_params(vocab_size, embedding_dim=30, hidden_dim=50, tag_dim=2, seed=0)

    key = jax.random.PRNGKey(0)
    sentence = jax.random.randint(key, (B, T), 0, vocab_size, dtype=jnp.int32)
    sentence_lens = jnp.array([T, T - 2], dtype=jnp.int32)

    tag_scores, loss = mynet_forward(sentence, sentence_lens, params)
    tag_scores = jax.block_until_ready(tag_scores)
    assert tag_scores.shape == (B, T, 2) and loss is None
    assert bool(jnp.all(jnp.isfinite(tag_scores)))

    ref = _reference_forward(sentence, params)
    err = float(jnp.max(jnp.abs(tag_scores - ref)))
    # Loose tolerance accounts for bf16 recurrent/tag-head matmul operands (f32 accumulation).
    assert err < 1e-1, f"kernel/reference mismatch: max abs err = {err}"
    print("KERNEL_OK")
</pallas_src>

<mosaic_0001>
module attributes {stable_mosaic.version = 11 : i64} {
  func.func @_mynet_kernel(%arg0: memref<16x1xi32, #tpu.memory_space<vmem>>, %arg1: memref<128x256xf32, #tpu.memory_space<vmem>>, %arg2: memref<64x256xbf16, #tpu.memory_space<vmem>>, %arg3: memref<64x128xbf16, #tpu.memory_space<vmem>>, %arg4: memref<1x128xf32, #tpu.memory_space<vmem>>, %arg5: memref<16x128xf32, #tpu.memory_space<vmem>>, %arg6: memref<16x64xf32, #tpu.memory_space<vmem>>) attributes {dimension_semantics = [], scalar_prefetch = 0 : i64, scratch_operands = 1 : i64, tpu.core_type = #tpu.core_type<tc>} {
    %c0 = arith.constant 0 : index
    %c0_0 = arith.constant 0 : index
    %0 = vector.load %arg0[%c0, %c0_0] : memref<16x1xi32, #tpu.memory_space<vmem>>, vector<16x1xi32>
    %1 = tpu.iota {dimensions = array<i32: 1>} : vector<16x128xi32>
    %2 = vector.broadcast %0 : vector<16x1xi32> to vector<16x128xi32>
    %3 = arith.cmpi eq, %2, %1 : vector<16x128xi32>
    %4 = arith.extui %3 : vector<16x128xi1> to vector<16x128xi32>
    %5 = arith.sitofp %4 : vector<16x128xi32> to vector<16x128xf32>
    %c0_1 = arith.constant 0 : index
    %c0_2 = arith.constant 0 : index
    %6 = vector.load %arg1[%c0_1, %c0_2] : memref<128x256xf32, #tpu.memory_space<vmem>>, vector<128x256xf32>
    %cst = arith.constant dense<0.000000e+00> : vector<16x256xf32>
    %7 = tpu.matmul %5, %6, %cst {dimension_numbers = #tpu.dot_dimension_numbers<[1], [0], [0], [1], [0, 0, 1, 1], [], []>} : vector<16x128xf32>, vector<128x256xf32>, vector<16x256xf32> -> vector<16x256xf32>
    %c0_3 = arith.constant 0 : index
    %c0_4 = arith.constant 0 : index
    %8 = vector.load %arg2[%c0_3, %c0_4] : memref<64x256xbf16, #tpu.memory_space<vmem>>, vector<64x256xbf16>
    %9 = tpu.iota {dimensions = array<i32: 1>} : vector<2x256xi32>
    %c64_i32 = arith.constant 64 : i32
    %c0_i32 = arith.constant 0 : i32
    %10 = arith.cmpi eq, %c64_i32, %c0_i32 : i32
    %c1_i32 = arith.constant 1 : i32
    %11 = arith.select %10, %c1_i32, %c64_i32 : i32
    %12 = vector.broadcast %11 : i32 to vector<2x256xi32>
    %13 = arith.remsi %9, %12 : vector<2x256xi32>
    %c0_i32_5 = arith.constant 0 : i32
    %14 = vector.broadcast %c0_i32_5 : i32 to vector<2x256xi32>
    %15 = arith.cmpi ne, %13, %14 : vector<2x256xi32>
    %c0_i32_6 = arith.constant 0 : i32
    %16 = vector.broadcast %c0_i32_6 : i32 to vector<2x256xi32>
    %17 = arith.cmpi slt, %13, %16 : vector<2x256xi32>
    %c0_i32_7 = arith.constant 0 : i32
    %18 = arith.cmpi slt, %11, %c0_i32_7 : i32
    %19 = vector.broadcast %18 : i1 to vector<2x256xi1>
    %20 = vector.broadcast %19 : vector<2x256xi1> to vector<2x256xi1>
    %21 = arith.xori %17, %20 : vector<2x256xi1>
    %22 = arith.andi %21, %15 : vector<2x256xi1>
    %23 = vector.broadcast %11 : i32 to vector<2x256xi32>
    %24 = arith.addi %13, %23 : vector<2x256xi32>
    %25 = arith.select %22, %24, %13 : vector<2x256xi1>, vector<2x256xi32>
    %c32_i32 = arith.constant 32 : i32
    %26 = vector.broadcast %c32_i32 : i32 to vector<2x256xi32>
    %27 = arith.cmpi slt, %25, %26 : vector<2x256xi32>
    %cst_8 = arith.constant 0.000000e+00 : f32
    %28 = vector.broadcast %cst_8 : f32 to vector<2x64xf32>
    %29 = vector.extract_strided_slice %7 {offsets = [0, 0], sizes = [2, 256], strides = [1, 1]} : vector<16x256xf32> to vector<2x256xf32>
    %30 = vector.extract_strided_slice %7 {offsets = [14, 0], sizes = [2, 256], strides = [1, 1]} : vector<16x256xf32> to vector<2x256xf32>
    %31 = arith.select %27, %29, %30 : vector<2x256xi1>, vector<2x256xf32>
    %32 = arith.negf %31 : vector<2x256xf32>
    %33 = math.exp %32 : vector<2x256xf32>
    %cst_9 = arith.constant 1.000000e+00 : f32
    %34 = vector.broadcast %cst_9 : f32 to vector<2x256xf32>
    %35 = arith.addf %34, %33 : vector<2x256xf32>
    %36 = arith.divf %34, %35 : vector<2x256xf32>
    %37 = vector.extract_strided_slice %36 {offsets = [0, 0], sizes = [2, 64], strides = [1, 1]} : vector<2x256xf32> to vector<2x64xf32>
    %38 = vector.extract_strided_slice %36 {offsets = [0, 64], sizes = [2, 64], strides = [1, 1]} : vector<2x256xf32> to vector<2x64xf32>
    %39 = vector.extract_strided_slice %31 {offsets = [0, 128], sizes = [2, 64], strides = [1, 1]} : vector<2x256xf32> to vector<2x64xf32>
    %40 = math.tanh %39 : vector<2x64xf32>
    %41 = vector.extract_strided_slice %36 {offsets = [0, 192], sizes = [2, 64], strides = [1, 1]} : vector<2x256xf32> to vector<2x64xf32>
    %42 = arith.mulf %38, %28 : vector<2x64xf32>
    %43 = arith.mulf %37, %40 : vector<2x64xf32>
    %44 = arith.addf %42, %43 : vector<2x64xf32>
    %45 = math.tanh %44 : vector<2x64xf32>
    %46 = arith.mulf %41, %45 : vector<2x64xf32>
    %47 = vector.extract_strided_slice %46 {offsets = [0, 0], sizes = [2, 32], strides = [1, 1]} : vector<2x64xf32> to vector<2x32xf32>
    %c0_10 = arith.constant 0 : index
    %c0_11 = arith.constant 0 : index
    %48 = vector.load %arg6[%c0_10, %c0_11] : memref<16x64xf32, #tpu.memory_space<vmem>>, vector<2x32xf32>
    tpu.vector_store %arg6[%c0_10, %c0_11], %47 {strides = array<i32>} : memref<16x64xf32, #tpu.memory_space<vmem>>, vector<2x32xf32>,
    %49 = vector.extract_strided_slice %46 {offsets = [0, 32], sizes = [2, 32], strides = [1, 1]} : vector<2x64xf32> to vector<2x32xf32>
    %c14 = arith.constant 14 : index
    %c32 = arith.constant 32 : index
    %50 = vector.load %arg6[%c14, %c32] : memref<16x64xf32, #tpu.memory_space<vmem>>, vector<2x32xf32>
    tpu.vector_store %arg6[%c14, %c32], %49 {strides = array<i32>} : memref<16x64xf32, #tpu.memory_space<vmem>>, vector<2x32xf32>,
    %51 = vector.extract_strided_slice %7 {offsets = [2, 0], sizes = [2, 256], strides = [1, 1]} : vector<16x256xf32> to vector<2x256xf32>
    %52 = vector.extract_strided_slice %7 {offsets = [12, 0], sizes = [2, 256], strides = [1, 1]} : vector<16x256xf32> to vector<2x256xf32>
    %53 = arith.select %27, %51, %52 : vector<2x256xi1>, vector<2x256xf32>
    %54 = arith.truncf %46 : vector<2x64xf32> to vector<2x64xbf16>
    %cst_12 = arith.constant dense<0.000000e+00> : vector<2x256xf32>
    %55 = tpu.matmul %54, %8, %cst_12 {dimension_numbers = #tpu.dot_dimension_numbers<[1], [0], [0], [1], [0, 0, 1, 1], [], []>} : vector<2x64xbf16>, vector<64x256xbf16>, vector<2x256xf32> -> vector<2x256xf32>
    %56 = arith.addf %53, %55 : vector<2x256xf32>
    %57 = arith.negf %56 : vector<2x256xf32>
    %58 = math.exp %57 : vector<2x256xf32>
    %cst_13 = arith.constant 1.000000e+00 : f32
    %59 = vector.broadcast %cst_13 : f32 to vector<2x256xf32>
    %60 = arith.addf %59, %58 : vector<2x256xf32>
    %61 = arith.divf %59, %60 : vector<2x256xf32>
    %62 = vector.extract_strided_slice %61 {offsets = [0, 0], sizes = [2, 64], strides = [1, 1]} : vector<2x256xf32> to vector<2x64xf32>
    %63 = vector.extract_strided_slice %61 {offsets = [0, 64], sizes = [2, 64], strides = [1, 1]} : vector<2x256xf32> to vector<2x64xf32>
    %64 = vector.extract_strided_slice %56 {offsets = [0, 128], sizes = [2, 64], strides = [1, 1]} : vector<2x256xf32> to vector<2x64xf32>
    %65 = math.tanh %64 : vector<2x64xf32>
    %66 = vector.extract_strided_slice %61 {offsets = [0, 192], sizes = [2, 64], strides = [1, 1]} : vector<2x256xf32> to vector<2x64xf32>
    %67 = arith.mulf %63, %44 : vector<2x64xf32>
    %68 = arith.mulf %62, %65 : vector<2x64xf32>
    %69 = arith.addf %67, %68 : vector<2x64xf32>
    %70 = math.tanh %69 : vector<2x64xf32>
    %71 = arith.mulf %66, %70 : vector<2x64xf32>
    %72 = vector.extract_strided_slice %71 {offsets = [0, 0], sizes = [2, 32], strides = [1, 1]} : vector<2x64xf32> to vector<2x32xf32>
    %c2 = arith.constant 2 : index
    %c0_14 = arith.constant 0 : index
    %73 = vector.load %arg6[%c2, %c0_14] : memref<16x64xf32, #tpu.memory_space<vmem>>, vector<2x32xf32>
    tpu.vector_store %arg6[%c2, %c0_14], %72 {strides = array<i32>} : memref<16x64xf32, #tpu.memory_space<vmem>>, vector<2x32xf32>,
    %74 = vector.extract_strided_slice %71 {offsets = [0, 32], sizes = [2, 32], strides = [1, 1]} : vector<2x64xf32> to vector<2x32xf32>
    %c12 = arith.constant 12 : index
    %c32_15 = arith.constant 32 : index
    %75 = vector.load %arg6[%c12, %c32_15] : memref<16x64xf32, #tpu.memory_space<vmem>>, vector<2x32xf32>
    tpu.vector_store %arg6[%c12, %c32_15], %74 {strides = array<i32>} : memref<16x64xf32, #tpu.memory_space<vmem>>, vector<2x32xf32>,
    %76 = vector.extract_strided_slice %7 {offsets = [4, 0], sizes = [2, 256], strides = [1, 1]} : vector<16x256xf32> to vector<2x256xf32>
    %77 = vector.extract_strided_slice %7 {offsets = [10, 0], sizes = [2, 256], strides = [1, 1]} : vector<16x256xf32> to vector<2x256xf32>
    %78 = arith.select %27, %76, %77 : vector<2x256xi1>, vector<2x256xf32>
    %79 = arith.truncf %71 : vector<2x64xf32> to vector<2x64xbf16>
    %cst_16 = arith.constant dense<0.000000e+00> : vector<2x256xf32>
    %80 = tpu.matmul %79, %8, %cst_16 {dimension_numbers = #tpu.dot_dimension_numbers<[1], [0], [0], [1], [0, 0, 1, 1], [], []>} : vector<2x64xbf16>, vector<64x256xbf16>, vector<2x256xf32> -> vector<2x256xf32>
    %81 = arith.addf %78, %80 : vector<2x256xf32>
    %82 = arith.negf %81 : vector<2x256xf32>
    %83 = math.exp %82 : vector<2x256xf32>
    %cst_17 = arith.constant 1.000000e+00 : f32
    %84 = vector.broadcast %cst_17 : f32 to vector<2x256xf32>
    %85 = arith.addf %84, %83 : vector<2x256xf32>
    %86 = arith.divf %84, %85 : vector<2x256xf32>
    %87 = vector.extract_strided_slice %86 {offsets = [0, 0], sizes = [2, 64], strides = [1, 1]} : vector<2x256xf32> to vector<2x64xf32>
    %88 = vector.extract_strided_slice %86 {offsets = [0, 64], sizes = [2, 64], strides = [1, 1]} : vector<2x256xf32> to vector<2x64xf32>
    %89 = vector.extract_strided_slice %81 {offsets = [0, 128], sizes = [2, 64], strides = [1, 1]} : vector<2x256xf32> to vector<2x64xf32>
    %90 = math.tanh %89 : vector<2x64xf32>
    %91 = vector.extract_strided_slice %86 {offsets = [0, 192], sizes = [2, 64], strides = [1, 1]} : vector<2x256xf32> to vector<2x64xf32>
    %92 = arith.mulf %88, %69 : vector<2x64xf32>
    %93 = arith.mulf %87, %90 : vector<2x64xf32>
    %94 = arith.addf %92, %93 : vector<2x64xf32>
    %95 = math.tanh %94 : vector<2x64xf32>
    %96 = arith.mulf %91, %95 : vector<2x64xf32>
    %97 = vector.extract_strided_slice %96 {offsets = [0, 0], sizes = [2, 32], strides = [1, 1]} : vector<2x64xf32> to vector<2x32xf32>
    %c4 = arith.constant 4 : index
    %c0_18 = arith.constant 0 : index
    %98 = vector.load %arg6[%c4, %c0_18] : memref<16x64xf32, #tpu.memory_space<vmem>>, vector<2x32xf32>
    tpu.vector_store %arg6[%c4, %c0_18], %97 {strides = array<i32>} : memref<16x64xf32, #tpu.memory_space<vmem>>, vector<2x32xf32>,
    %99 = vector.extract_strided_slice %96 {offsets = [0, 32], sizes = [2, 32], strides = [1, 1]} : vector<2x64xf32> to vector<2x32xf32>
    %c10 = arith.constant 10 : index
    %c32_19 = arith.constant 32 : index
    %100 = vector.load %arg6[%c10, %c32_19] : memref<16x64xf32, #tpu.memory_space<vmem>>, vector<2x32xf32>
    tpu.vector_store %arg6[%c10, %c32_19], %99 {strides = array<i32>} : memref<16x64xf32, #tpu.memory_space<vmem>>, vector<2x32xf32>,
    %101 = vector.extract_strided_slice %7 {offsets = [6, 0], sizes = [2, 256], strides = [1, 1]} : vector<16x256xf32> to vector<2x256xf32>
    %102 = vector.extract_strided_slice %7 {offsets = [8, 0], sizes = [2, 256], strides = [1, 1]} : vector<16x256xf32> to vector<2x256xf32>
    %103 = arith.select %27, %101, %102 : vector<2x256xi1>, vector<2x256xf32>
    %104 = arith.truncf %96 : vector<2x64xf32> to vector<2x64xbf16>
    %cst_20 = arith.constant dense<0.000000e+00> : vector<2x256xf32>
    %105 = tpu.matmul %104, %8, %cst_20 {dimension_numbers = #tpu.dot_dimension_numbers<[1], [0], [0], [1], [0, 0, 1, 1], [], []>} : vector<2x64xbf16>, vector<64x256xbf16>, vector<2x256xf32> -> vector<2x256xf32>
    %106 = arith.addf %103, %105 : vector<2x256xf32>
    %107 = arith.negf %106 : vector<2x256xf32>
    %108 = math.exp %107 : vector<2x256xf32>
    %cst_21 = arith.constant 1.000000e+00 : f32
    %109 = vector.broadcast %cst_21 : f32 to vector<2x256xf32>
    %110 = arith.addf %109, %108 : vector<2x256xf32>
    %111 = arith.divf %109, %110 : vector<2x256xf32>
    %112 = vector.extract_strided_slice %111 {offsets = [0, 0], sizes = [2, 64], strides = [1, 1]} : vector<2x256xf32> to vector<2x64xf32>
    %113 = vector.extract_strided_slice %111 {offsets = [0, 64], sizes = [2, 64], strides = [1, 1]} : vector<2x256xf32> to vector<2x64xf32>
    %114 = vector.extract_strided_slice %106 {offsets = [0, 128], sizes = [2, 64], strides = [1, 1]} : vector<2x256xf32> to vector<2x64xf32>
    %115 = math.tanh %114 : vector<2x64xf32>
    %116 = vector.extract_strided_slice %111 {offsets = [0, 192], sizes = [2, 64], strides = [1, 1]} : vector<2x256xf32> to vector<2x64xf32>
    %117 = arith.mulf %113, %94 : vector<2x64xf32>
    %118 = arith.mulf %112, %115 : vector<2x64xf32>
    %119 = arith.addf %117, %118 : vector<2x64xf32>
    %120 = math.tanh %119 : vector<2x64xf32>
    %121 = arith.mulf %116, %120 : vector<2x64xf32>
    %122 = vector.extract_strided_slice %121 {offsets = [0, 0], sizes = [2, 32], strides = [1, 1]} : vector<2x64xf32> to vector<2x32xf32>
    %c6 = arith.constant 6 : index
    %c0_22 = arith.constant 0 : index
    %123 = vector.load %arg6[%c6, %c0_22] : memref<16x64xf32, #tpu.memory_space<vmem>>, vector<2x32xf32>
    tpu.vector_store %arg6[%c6, %c0_22], %122 {strides = array<i32>} : memref<16x64xf32, #tpu.memory_space<vmem>>, vector<2x32xf32>,
    %124 = vector.extract_strided_slice %121 {offsets = [0, 32], sizes = [2, 32], strides = [1, 1]} : vector<2x64xf32> to vector<2x32xf32>
    %c8 = arith.constant 8 : index
    %c32_23 = arith.constant 32 : index
    %125 = vector.load %arg6[%c8, %c32_23] : memref<16x64xf32, #tpu.memory_space<vmem>>, vector<2x32xf32>
    tpu.vector_store %arg6[%c8, %c32_23], %124 {strides = array<i32>} : memref<16x64xf32, #tpu.memory_space<vmem>>, vector<2x32xf32>,
    %126 = vector.extract_strided_slice %7 {offsets = [8, 0], sizes = [2, 256], strides = [1, 1]} : vector<16x256xf32> to vector<2x256xf32>
    %127 = vector.extract_strided_slice %7 {offsets = [6, 0], sizes = [2, 256], strides = [1, 1]} : vector<16x256xf32> to vector<2x256xf32>
    %128 = arith.select %27, %126, %127 : vector<2x256xi1>, vector<2x256xf32>
    %129 = arith.truncf %121 : vector<2x64xf32> to vector<2x64xbf16>
    %cst_24 = arith.constant dense<0.000000e+00> : vector<2x256xf32>
    %130 = tpu.matmul %129, %8, %cst_24 {dimension_numbers = #tpu.dot_dimension_numbers<[1], [0], [0], [1], [0, 0, 1, 1], [], []>} : vector<2x64xbf16>, vector<64x256xbf16>, vector<2x256xf32> -> vector<2x256xf32>
    %131 = arith.addf %128, %130 : vector<2x256xf32>
    %132 = arith.negf %131 : vector<2x256xf32>
    %133 = math.exp %132 : vector<2x256xf32>
    %cst_25 = arith.constant 1.000000e+00 : f32
    %134 = vector.broadcast %cst_25 : f32 to vector<2x256xf32>
    %135 = arith.addf %134, %133 : vector<2x256xf32>
    %136 = arith.divf %134, %135 : vector<2x256xf32>
    %137 = vector.extract_strided_slice %136 {offsets = [0, 0], sizes = [2, 64], strides = [1, 1]} : vector<2x256xf32> to vector<2x64xf32>
    %138 = vector.extract_strided_slice %136 {offsets = [0, 64], sizes = [2, 64], strides = [1, 1]} : vector<2x256xf32> to vector<2x64xf32>
    %139 = vector.extract_strided_slice %131 {offsets = [0, 128], sizes = [2, 64], strides = [1, 1]} : vector<2x256xf32> to vector<2x64xf32>
    %140 = math.tanh %139 : vector<2x64xf32>
    %141 = vector.extract_strided_slice %136 {offsets = [0, 192], sizes = [2, 64], strides = [1, 1]} : vector<2x256xf32> to vector<2x64xf32>
    %142 = arith.mulf %138, %119 : vector<2x64xf32>
    %143 = arith.mulf %137, %140 : vector<2x64xf32>
    %144 = arith.addf %142, %143 : vector<2x64xf32>
    %145 = math.tanh %144 : vector<2x64xf32>
    %146 = arith.mulf %141, %145 : vector<2x64xf32>
    %147 = vector.extract_strided_slice %146 {offsets = [0, 0], sizes = [2, 32], strides = [1, 1]} : vector<2x64xf32> to vector<2x32xf32>
    %c8_26 = arith.constant 8 : index
    %c0_27 = arith.constant 0 : index
    %148 = vector.load %arg6[%c8_26, %c0_27] : memref<16x64xf32, #tpu.memory_space<vmem>>, vector<2x32xf32>
    tpu.vector_store %arg6[%c8_26, %c0_27], %147 {strides = array<i32>} : memref<16x64xf32, #tpu.memory_space<vmem>>, vector<2x32xf32>,
    %149 = vector.extract_strided_slice %146 {offsets = [0, 32], sizes = [2, 32], strides = [1, 1]} : vector<2x64xf32> to vector<2x32xf32>
    %c6_28 = arith.constant 6 : index
    %c32_29 = arith.constant 32 : index
    %150 = vector.load %arg6[%c6_28, %c32_29] : memref<16x64xf32, #tpu.memory_space<vmem>>, vector<2x32xf32>
    tpu.vector_store %arg6[%c6_28, %c32_29], %149 {strides = array<i32>} : memref<16x64xf32, #tpu.memory_space<vmem>>, vector<2x32xf32>,
    %151 = vector.extract_strided_slice %7 {offsets = [10, 0], sizes = [2, 256], strides = [1, 1]} : vector<16x256xf32> to vector<2x256xf32>
    %152 = vector.extract_strided_slice %7 {offsets = [4, 0], sizes = [2, 256], strides = [1, 1]} : vector<16x256xf32> to vector<2x256xf32>
    %153 = arith.select %27, %151, %152 : vector<2x256xi1>, vector<2x256xf32>
    %154 = arith.truncf %146 : vector<2x64xf32> to vector<2x64xbf16>
    %cst_30 = arith.constant dense<0.000000e+00> : vector<2x256xf32>
    %155 = tpu.matmul %154, %8, %cst_30 {dimension_numbers = #tpu.dot_dimension_numbers<[1], [0], [0], [1], [0, 0, 1, 1], [], []>} : vector<2x64xbf16>, vector<64x256xbf16>, vector<2x256xf32> -> vector<2x256xf32>
    %156 = arith.addf %153, %155 : vector<2x256xf32>
    %157 = arith.negf %156 : vector<2x256xf32>
    %158 = math.exp %157 : vector<2x256xf32>
    %cst_31 = arith.constant 1.000000e+00 : f32
    %159 = vector.broadcast %cst_31 : f32 to vector<2x256xf32>
    %160 = arith.addf %159, %158 : vector<2x256xf32>
    %161 = arith.divf %159, %160 : vector<2x256xf32>
    %162 = vector.extract_strided_slice %161 {offsets = [0, 0], sizes = [2, 64], strides = [1, 1]} : vector<2x256xf32> to vector<2x64xf32>
    %163 = vector.extract_strided_slice %161 {offsets = [0, 64], sizes = [2, 64], strides = [1, 1]} : vector<2x256xf32> to vector<2x64xf32>
    %164 = vector.extract_strided_slice %156 {offsets = [0, 128], sizes = [2, 64], strides = [1, 1]} : vector<2x256xf32> to vector<2x64xf32>
    %165 = math.tanh %164 : vector<2x64xf32>
    %166 = vector.extract_strided_slice %161 {offsets = [0, 192], sizes = [2, 64], strides = [1, 1]} : vector<2x256xf32> to vector<2x64xf32>
    %167 = arith.mulf %163, %144 : vector<2x64xf32>
    %168 = arith.mulf %162, %165 : vector<2x64xf32>
    %169 = arith.addf %167, %168 : vector<2x64xf32>
    %170 = math.tanh %169 : vector<2x64xf32>
    %171 = arith.mulf %166, %170 : vector<2x64xf32>
    %172 = vector.extract_strided_slice %171 {offsets = [0, 0], sizes = [2, 32], strides = [1, 1]} : vector<2x64xf32> to vector<2x32xf32>
    %c10_32 = arith.constant 10 : index
    %c0_33 = arith.constant 0 : index
    %173 = vector.load %arg6[%c10_32, %c0_33] : memref<16x64xf32, #tpu.memory_space<vmem>>, vector<2x32xf32>
    tpu.vector_store %arg6[%c10_32, %c0_33], %172 {strides = array<i32>} : memref<16x64xf32, #tpu.memory_space<vmem>>, vector<2x32xf32>,
    %174 = vector.extract_strided_slice %171 {offsets = [0, 32], sizes = [2, 32], strides = [1, 1]} : vector<2x64xf32> to vector<2x32xf32>
    %c4_34 = arith.constant 4 : index
    %c32_35 = arith.constant 32 : index
    %175 = vector.load %arg6[%c4_34, %c32_35] : memref<16x64xf32, #tpu.memory_space<vmem>>, vector<2x32xf32>
    tpu.vector_store %arg6[%c4_34, %c32_35], %174 {strides = array<i32>} : memref<16x64xf32, #tpu.memory_space<vmem>>, vector<2x32xf32>,
    %176 = vector.extract_strided_slice %7 {offsets = [12, 0], sizes = [2, 256], strides = [1, 1]} : vector<16x256xf32> to vector<2x256xf32>
    %177 = vector.extract_strided_slice %7 {offsets = [2, 0], sizes = [2, 256], strides = [1, 1]} : vector<16x256xf32> to vector<2x256xf32>
    %178 = arith.select %27, %176, %177 : vector<2x256xi1>, vector<2x256xf32>
    %179 = arith.truncf %171 : vector<2x64xf32> to vector<2x64xbf16>
    %cst_36 = arith.constant dense<0.000000e+00> : vector<2x256xf32>
    %180 = tpu.matmul %179, %8, %cst_36 {dimension_numbers = #tpu.dot_dimension_numbers<[1], [0], [0], [1], [0, 0, 1, 1], [], []>} : vector<2x64xbf16>, vector<64x256xbf16>, vector<2x256xf32> -> vector<2x256xf32>
    %181 = arith.addf %178, %180 : vector<2x256xf32>
    %182 = arith.negf %181 : vector<2x256xf32>
    %183 = math.exp %182 : vector<2x256xf32>
    %cst_37 = arith.constant 1.000000e+00 : f32
    %184 = vector.broadcast %cst_37 : f32 to vector<2x256xf32>
    %185 = arith.addf %184, %183 : vector<2x256xf32>
    %186 = arith.divf %184, %185 : vector<2x256xf32>
    %187 = vector.extract_strided_slice %186 {offsets = [0, 0], sizes = [2, 64], strides = [1, 1]} : vector<2x256xf32> to vector<2x64xf32>
    %188 = vector.extract_strided_slice %186 {offsets = [0, 64], sizes = [2, 64], strides = [1, 1]} : vector<2x256xf32> to vector<2x64xf32>
    %189 = vector.extract_strided_slice %181 {offsets = [0, 128], sizes = [2, 64], strides = [1, 1]} : vector<2x256xf32> to vector<2x64xf32>
    %190 = math.tanh %189 : vector<2x64xf32>
    %191 = vector.extract_strided_slice %186 {offsets = [0, 192], sizes = [2, 64], strides = [1, 1]} : vector<2x256xf32> to vector<2x64xf32>
    %192 = arith.mulf %188, %169 : vector<2x64xf32>
    %193 = arith.mulf %187, %190 : vector<2x64xf32>
    %194 = arith.addf %192, %193 : vector<2x64xf32>
    %195 = math.tanh %194 : vector<2x64xf32>
    %196 = arith.mulf %191, %195 : vector<2x64xf32>
    %197 = vector.extract_strided_slice %196 {offsets = [0, 0], sizes = [2, 32], strides = [1, 1]} : vector<2x64xf32> to vector<2x32xf32>
    %c12_38 = arith.constant 12 : index
    %c0_39 = arith.constant 0 : index
    %198 = vector.load %arg6[%c12_38, %c0_39] : memref<16x64xf32, #tpu.memory_space<vmem>>, vector<2x32xf32>
    tpu.vector_store %arg6[%c12_38, %c0_39], %197 {strides = array<i32>} : memref<16x64xf32, #tpu.memory_space<vmem>>, vector<2x32xf32>,
    %199 = vector.extract_strided_slice %196 {offsets = [0, 32], sizes = [2, 32], strides = [1, 1]} : vector<2x64xf32> to vector<2x32xf32>
    %c2_40 = arith.constant 2 : index
    %c32_41 = arith.constant 32 : index
    %200 = vector.load %arg6[%c2_40, %c32_41] : memref<16x64xf32, #tpu.memory_space<vmem>>, vector<2x32xf32>
    tpu.vector_store %arg6[%c2_40, %c32_41], %199 {strides = array<i32>} : memref<16x64xf32, #tpu.memory_space<vmem>>, vector<2x32xf32>,
    %201 = vector.extract_strided_slice %7 {offsets = [14, 0], sizes = [2, 256], strides = [1, 1]} : vector<16x256xf32> to vector<2x256xf32>
    %202 = vector.extract_strided_slice %7 {offsets = [0, 0], sizes = [2, 256], strides = [1, 1]} : vector<16x256xf32> to vector<2x256xf32>
    %203 = arith.select %27, %201, %202 : vector<2x256xi1>, vector<2x256xf32>
    %204 = arith.truncf %196 : vector<2x64xf32> to vector<2x64xbf16>
    %cst_42 = arith.constant dense<0.000000e+00> : vector<2x256xf32>
    %205 = tpu.matmul %204, %8, %cst_42 {dimension_numbers = #tpu.dot_dimension_numbers<[1], [0], [0], [1], [0, 0, 1, 1], [], []>} : vector<2x64xbf16>, vector<64x256xbf16>, vector<2x256xf32> -> vector<2x256xf32>
    %206 = arith.addf %203, %205 : vector<2x256xf32>
    %207 = arith.negf %206 : vector<2x256xf32>
    %208 = math.exp %207 : vector<2x256xf32>
    %cst_43 = arith.constant 1.000000e+00 : f32
    %209 = vector.broadcast %cst_43 : f32 to vector<2x256xf32>
    %210 = arith.addf %209, %208 : vector<2x256xf32>
    %211 = arith.divf %209, %210 : vector<2x256xf32>
    %212 = vector.extract_strided_slice %211 {offsets = [0, 0], sizes = [2, 64], strides = [1, 1]} : vector<2x256xf32> to vector<2x64xf32>
    %213 = vector.extract_strided_slice %211 {offsets = [0, 64], sizes = [2, 64], strides = [1, 1]} : vector<2x256xf32> to vector<2x64xf32>
    %214 = vector.extract_strided_slice %206 {offsets = [0, 128], sizes = [2, 64], strides = [1, 1]} : vector<2x256xf32> to vector<2x64xf32>
    %215 = math.tanh %214 : vector<2x64xf32>
    %216 = vector.extract_strided_slice %211 {offsets = [0, 192], sizes = [2, 64], strides = [1, 1]} : vector<2x256xf32> to vector<2x64xf32>
    %217 = arith.mulf %213, %194 : vector<2x64xf32>
    %218 = arith.mulf %212, %215 : vector<2x64xf32>
    %219 = arith.addf %217, %218 : vector<2x64xf32>
    %220 = math.tanh %219 : vector<2x64xf32>
    %221 = arith.mulf %216, %220 : vector<2x64xf32>
    %222 = vector.extract_strided_slice %221 {offsets = [0, 0], sizes = [2, 32], strides = [1, 1]} : vector<2x64xf32> to vector<2x32xf32>
    %c14_44 = arith.constant 14 : index
    %c0_45 = arith.constant 0 : index
    %223 = vector.load %arg6[%c14_44, %c0_45] : memref<16x64xf32, #tpu.memory_space<vmem>>, vector<2x32xf32>
    tpu.vector_store %arg6[%c14_44, %c0_45], %222 {strides = array<i32>} : memref<16x64xf32, #tpu.memory_space<vmem>>, vector<2x32xf32>,
    %224 = vector.extract_strided_slice %221 {offsets = [0, 32], sizes = [2, 32], strides = [1, 1]} : vector<2x64xf32> to vector<2x32xf32>
    %c0_46 = arith.constant 0 : index
    %c32_47 = arith.constant 32 : index
    %225 = vector.load %arg6[%c0_46, %c32_47] : memref<16x64xf32, #tpu.memory_space<vmem>>, vector<2x32xf32>
    tpu.vector_store %arg6[%c0_46, %c32_47], %224 {strides = array<i32>} : memref<16x64xf32, #tpu.memory_space<vmem>>, vector<2x32xf32>,
    %c0_48 = arith.constant 0 : index
    %c0_49 = arith.constant 0 : index
    %226 = vector.load %arg6[%c0_48, %c0_49] : memref<16x64xf32, #tpu.memory_space<vmem>>, vector<16x64xf32>
    %cst_50 = arith.constant 0.000000e+00 : f32
    %227 = vector.broadcast %cst_50 : f32 to vector<16x64xf32>
    %228 = arith.maximumf %226, %227 : vector<16x64xf32>
    %229 = arith.truncf %228 : vector<16x64xf32> to vector<16x64xbf16>
    %c0_51 = arith.constant 0 : index
    %c0_52 = arith.constant 0 : index
    %230 = vector.load %arg3[%c0_51, %c0_52] : memref<64x128xbf16, #tpu.memory_space<vmem>>, vector<64x128xbf16>
    %cst_53 = arith.constant dense<0.000000e+00> : vector<16x128xf32>
    %231 = tpu.matmul %229, %230, %cst_53 {dimension_numbers = #tpu.dot_dimension_numbers<[1], [0], [0], [1], [0, 0, 1, 1], [], []>} : vector<16x64xbf16>, vector<64x128xbf16>, vector<16x128xf32> -> vector<16x128xf32>
    %c0_54 = arith.constant 0 : index
    %c0_55 = arith.constant 0 : index
    %232 = vector.load %arg4[%c0_54, %c0_55] : memref<1x128xf32, #tpu.memory_space<vmem>>, vector<1x128xf32>
    %233 = vector.broadcast %232 : vector<1x128xf32> to vector<16x128xf32>
    %234 = arith.addf %231, %233 : vector<16x128xf32>
    %cst_56 = arith.constant dense<0xFF800000> : vector<16xf32>
    %235 = vector.multi_reduction <maximumf>, %234, %cst_56 [1] : vector<16x128xf32> to vector<16xf32>
    %236 = vector.shape_cast %235 : vector<16xf32> to vector<16x1xf32>
    %237 = vector.broadcast %236 : vector<16x1xf32> to vector<16x128xf32>
    %238 = arith.subf %234, %237 : vector<16x128xf32>
    %239 = math.exp %238 : vector<16x128xf32>
    %cst_57 = arith.constant dense<0.000000e+00> : vector<16xf32>
    %240 = vector.multi_reduction <add>, %239, %cst_57 [1] : vector<16x128xf32> to vector<16xf32>
    %241 = vector.shape_cast %240 : vector<16xf32> to vector<16x1xf32>
    %242 = math.log %241 : vector<16x1xf32>
    %243 = arith.addf %236, %242 : vector<16x1xf32>
    %244 = vector.broadcast %243 : vector<16x1xf32> to vector<16x128xf32>
    %245 = arith.subf %234, %244 : vector<16x128xf32>
    %c0_58 = arith.constant 0 : index
    %c0_59 = arith.constant 0 : index
    %246 = vector.load %arg5[%c0_58, %c0_59] : memref<16x128xf32, #tpu.memory_space<vmem>>, vector<16x128xf32>
    tpu.vector_store %arg5[%c0_58, %c0_59], %245 {strides = array<i32>} : memref<16x128xf32, #tpu.memory_space<vmem>>, vector<16x128xf32>,
    return
  }
}

</mosaic_0001>

<llo_original>
// kernel: tpu_custom_call.1
$region0: #{tpu_custom_call.1}
  #allocation0 [shape = 'u32[]', space=smem, size = 0x4, offset = 0x4, fixed_abs, tag = 'smem constant byte address 0x4 - core index']
  #allocation1 [shape = 'u32[144,128]{1,0:T(1,128)}', space=vmem, size = 0x12000, scoped, tag = 'internal scratch']
  #allocation2 [shape = 'f32[16,64]{1,0:T(8,128)}', space=vmem, size = 0x2000, scoped, tag = 'scratch operand']
  %s0 = inlined_call_operand.vmem [shape: s32[16,1], index: 0, kind: input, shape index: {}]
  %s1 = inlined_call_operand.hbm [shape: f32[128,256], index: 1, kind: input, shape index: {}]
  %s2 = inlined_call_operand.hbm [shape: bf16[64,256], index: 2, kind: input, shape index: {}]
  %s3 = inlined_call_operand.hbm [shape: bf16[64,128], index: 3, kind: input, shape index: {}]
  %s4 = inlined_call_operand.vmem [shape: f32[1,128], index: 4, kind: input, shape index: {}]
  %s5 = inlined_call_operand.hbm [shape: f32[16,128], index: 5, kind: output, shape index: {}]
  %s6 = sld [smem:[#allocation0]]
  $region42: #{tpu_custom_call.1} parent=0
    _
  %s8 = ssub.s32 1, %s6
  %s9 = scalar_select 0, %s8, %s6
  $region1: #{tpu_custom_call.1} parent=0
    #allocation3 [shape = 'u8[131072]{0}', space=vmem, size = 0x20000, scoped, tag = 'input window, operand 1, single buffered']
    #allocation4 [shape = 's32[1]{0}', space=sflag, size = 0x4, scoped, tag = 'scoped memory for tpu_custom_call.1']
    #allocation5 [shape = 's32[1]{0}', space=sflag, size = 0x4, scoped, tag = 'scoped memory for tpu_custom_call.1']
    #allocation6 [shape = 'u8[32768]{0}', space=vmem, size = 0x8000, scoped, tag = 'input window, operand 2, single buffered']
    #allocation7 [shape = 's32[1]{0}', space=sflag, size = 0x4, scoped, tag = 'scoped memory for tpu_custom_call.1']
    #allocation8 [shape = 'u8[16384]{0}', space=vmem, size = 0x4000, scoped, tag = 'input window, operand 3, single buffered']
    #allocation9 [shape = 'u8[8192]{0}', space=vmem, size = 0x2000, scoped, tag = 'output window, operand 0, single buffered']
    %10 = vsyncpa [#allocation4], 0
    %11 = vsyncpa [#allocation7], 0
    %12 = vsyncpa [#allocation5], 0
    // Predicated region
    $region2: #{tpu_custom_call.1} parent=1 // pred_check
      _
    $region3: #{tpu_custom_call.1} parent=1 // pred_check_branch
      %14 = sbr.rel (0) target = $region5
    $region4: #{tpu_custom_call.1} parent=1 // pred_region
      _
    $region5: #{tpu_custom_call.1} parent=1 // pred_fallthru
      _
    // Predicated region
    $region6: #{tpu_custom_call.1} parent=1 // pred_check
      _
    $region7: #{tpu_custom_call.1} parent=1 // pred_check_branch
      %16 = sbr.rel (0) target = $region9
    $region8: #{tpu_custom_call.1} parent=1 // pred_region
      %s18 = ssub.s32 4096, 4096
      %19 = vsyncadd [#allocation4], %s18
      %s20 = sshll.u32 [#allocation3], 4
      %s21 = int_to_ptr.vmem [resolvable:$true] %s20
      %26 = dma.hbm_to_vmem [thread:$0]  %s1, 4096, %s21, [#allocation4], 256, 256, 16
    $region9: #{tpu_custom_call.1} parent=1 // pred_fallthru
      _
    // Predicated region
    $region10: #{tpu_custom_call.1} parent=1 // pred_check
      _
    $region11: #{tpu_custom_call.1} parent=1 // pred_check_branch
      %28 = sbr.rel (0) target = $region13
    $region12: #{tpu_custom_call.1} parent=1 // pred_region
      %s30 = ssub.s32 1024, 1024
      %31 = vsyncadd [#allocation7], %s30
      %s32 = sshll.u32 [#allocation6], 4
      %s33 = int_to_ptr.vmem [resolvable:$true] %s32
      %38 = dma.hbm_to_vmem [thread:$0]  %s2, 1024, %s33, [#allocation7], 128, 128, 8
    $region13: #{tpu_custom_call.1} parent=1 // pred_fallthru
      _
    // Predicated region
    $region14: #{tpu_custom_call.1} parent=1 // pred_check
      _
    $region15: #{tpu_custom_call.1} parent=1 // pred_check_branch
      %40 = sbr.rel (0) target = $region17
    $region16: #{tpu_custom_call.1} parent=1 // pred_region
      %s42 = ssub.s32 512, 512
      %43 = vsyncadd [#allocation7], %s42
      %s44 = sshll.u32 [#allocation8], 4
      %s45 = int_to_ptr.vmem [resolvable:$true] %s44
      %50 = dma.hbm_to_vmem [thread:$0]  %s3, 512, %s45, [#allocation7], 64, 64, 4
    $region17: #{tpu_custom_call.1} parent=1 // pred_fallthru
      _
    // Predicated region
    $region18: #{tpu_custom_call.1} parent=1 // pred_check
      _
    $region19: #{tpu_custom_call.1} parent=1 // pred_check_branch
      %52 = sbr.rel (0) target = $region21
    $region20: #{tpu_custom_call.1} parent=1 // pred_region
      _
    $region21: #{tpu_custom_call.1} parent=1 // pred_fallthru
      _
    // Predicated region
    $region22: #{tpu_custom_call.1} parent=1 // pred_check
      _
    $region23: #{tpu_custom_call.1} parent=1 // pred_check_branch
      %54 = sbr.rel (0) target = $region25
    $region24: #{tpu_custom_call.1} parent=1 // pred_region
      %55 = dma.done [#allocation4], 4096
    $region25: #{tpu_custom_call.1} parent=1 // pred_fallthru
      _
    // Predicated region
    $region26: #{tpu_custom_call.1} parent=1 // pred_check
      _
    $region27: #{tpu_custom_call.1} parent=1 // pred_check_branch
      %57 = sbr.rel (0) target = $region29
    $region28: #{tpu_custom_call.1} parent=1 // pred_region
      %58 = dma.done [#allocation7], 1024
    $region29: #{tpu_custom_call.1} parent=1 // pred_fallthru
      _
    // Predicated region
    $region30: #{tpu_custom_call.1} parent=1 // pred_check
      _
    $region31: #{tpu_custom_call.1} parent=1 // pred_check_branch
      %60 = sbr.rel (0) target = $region33
    $region32: #{tpu_custom_call.1} parent=1 // pred_region
      %61 = dma.done [#allocation7], 512
    $region33: #{tpu_custom_call.1} parent=1 // pred_fallthru
      _
    %v63 = vld [vmem:[%s0] sm:$0xff]
    %v64 = vld [vmem:[%s0 + $0x8] sm:$0xff]
    %v65 = vlaneseq
    %v66 = vand.u32 %v65, 127
    %67 = vset.pattern.permute.xlu0 0
    %68 = vperm.xlu0 %67, %v63
    %v69 = vpop.permute.xlu0 %68
    %70 = vset.pattern.permute.xlu0 0
    %71 = vperm.xlu0 %70, %v64
    %v72 = vpop.permute.xlu0 %71
    %vm73 = vcmp.eq.s32.totalorder %v69, %v66
    %vm74 = vcmp.eq.s32.totalorder %v72, %v66
    %v75 = vsel %vm73, 1, 0
    %v76 = vsel %vm74, 1, 0
    %v77 = vcvt.s32.f32 %v75
    %v78 = vcvt.s32.f32 %v76
    %v79 = vld [vmem:[#allocation3] sm:$0xff]
    %v80 = vld [vmem:[#allocation3 + $0x8] sm:$0xff]
    %v81 = vld [vmem:[#allocation3 + $0x10] sm:$0xff]
    %v82 = vld [vmem:[#allocation3 + $0x18] sm:$0xff]
    %v83 = vld [vmem:[#allocation3 + $0x20] sm:$0xff]
    %v84 = vld [vmem:[#allocation3 + $0x28] sm:$0xff]
    %v85 = vld [vmem:[#allocation3 + $0x30] sm:$0xff]
    %v86 = vld [vmem:[#allocation3 + $0x38] sm:$0xff]
    %v87 = vld [vmem:[#allocation3 + $0x40] sm:$0xff]
    %v88 = vld [vmem:[#allocation3 + $0x48] sm:$0xff]
    %v89 = vld [vmem:[#allocation3 + $0x50] sm:$0xff]
    %v90 = vld [vmem:[#allocation3 + $0x58] sm:$0xff]
    %v91 = vld [vmem:[#allocation3 + $0x60] sm:$0xff]
    %v92 = vld [vmem:[#allocation3 + $0x68] sm:$0xff]
    %v93 = vld [vmem:[#allocation3 + $0x70] sm:$0xff]
    %v94 = vld [vmem:[#allocation3 + $0x78] sm:$0xff]
    %v95 = vld [vmem:[#allocation3 + $0x80] sm:$0xff]
    %v96 = vld [vmem:[#allocation3 + $0x88] sm:$0xff]
    %v97 = vld [vmem:[#allocation3 + $0x90] sm:$0xff]
    %v98 = vld [vmem:[#allocation3 + $0x98] sm:$0xff]
    %v99 = vld [vmem:[#allocation3 + $0xa0] sm:$0xff]
    %v100 = vld [vmem:[#allocation3 + $0xa8] sm:$0xff]
    %v101 = vld [vmem:[#allocation3 + $0xb0] sm:$0xff]
    %v102 = vld [vmem:[#allocation3 + $0xb8] sm:$0xff]
    %v103 = vld [vmem:[#allocation3 + $0xc0] sm:$0xff]
    %v104 = vld [vmem:[#allocation3 + $0xc8] sm:$0xff]
    %v105 = vld [vmem:[#allocation3 + $0xd0] sm:$0xff]
    %v106 = vld [vmem:[#allocation3 + $0xd8] sm:$0xff]
    %v107 = vld [vmem:[#allocation3 + $0xe0] sm:$0xff]
    %v108 = vld [vmem:[#allocation3 + $0xe8] sm:$0xff]
    %v109 = vld [vmem:[#allocation3 + $0xf0] sm:$0xff]
    %v110 = vld [vmem:[#allocation3 + $0xf8] sm:$0xff]
    %111 = vmatprep.subr.mxu0 %v110
    %112 = vmatpush1.msra.mxu0 %v109
    %113 = vmatprep.subr.mxu0 %v108
    %114 = vmatpush1.msra.mxu0 %v107
    %115 = vmatprep.subr.mxu0 %v106
    %116 = vmatpush1.msra.mxu0 %v105
    %117 = vmatprep.subr.mxu0 %v104
    %118 = vmatpush1.msra.mxu0 %v103
    %119 = vmatprep.subr.mxu0 %v102
    %120 = vmatpush1.msra.mxu0 %v101
    %121 = vmatprep.subr.mxu0 %v100
    %122 = vmatpush1.msra.mxu0 %v99
    %123 = vmatprep.subr.mxu0 %v98
    %124 = vmatpush1.msra.mxu0 %v97
    %125 = vmatprep.subr.mxu0 %v96
    %126 = vmatpush1.msra.mxu0 %v95
    %127 = vmatprep.subr.mxu0 %v94
    %128 = vmatpush1.msra.mxu0 %v93
    %129 = vmatprep.subr.mxu0 %v92
    %130 = vmatpush1.msra.mxu0 %v91
    %131 = vmatprep.subr.mxu0 %v90
    %132 = vmatpush1.msra.mxu0 %v89
    %133 = vmatprep.subr.mxu0 %v88
    %134 = vmatpush1.msra.mxu0 %v87
    %135 = vmatprep.subr.mxu0 %v86
    %136 = vmatpush1.msra.mxu0 %v85
    %137 = vmatprep.subr.mxu0 %v84
    %138 = vmatpush1.msra.mxu0 %v83
    %139 = vmatprep.subr.mxu0 %v82
    %140 = vmatpush1.msra.mxu0 %v81
    %141 = vmatprep.subr.mxu0 %v80
    %142 = vmatpush1.msra.mxu0 %v79
    %143 = vmatprep.subr.mxu0 0.0
    %144 = vmatpush2.msra.mxu0 0.0
    %145 = vmatprep.subr.mxu0 0.0
    %146 = vmatpush2.msra.mxu0 0.0
    %147 = vmatprep.subr.mxu0 0.0
    %148 = vmatpush2.msra.mxu0 0.0
    %149 = vmatprep.subr.mxu0 0.0
    %150 = vmatpush2.msra.mxu0 0.0
    %151 = vmatprep.subr.mxu0 0.0
    %152 = vmatpush2.msra.mxu0 0.0
    %153 = vmatprep.subr.mxu0 0.0
    %154 = vmatpush2.msra.mxu0 0.0
    %155 = vmatprep.subr.mxu0 0.0
    %156 = vmatpush2.msra.mxu0 0.0
    %157 = vmatprep.subr.mxu0 0.0
    %158 = vmatpush2.msra.mxu0 0.0
    %159 = vmatprep.subr.mxu0 0.0
    %160 = vmatpush2.msra.mxu0 0.0
    %161 = vmatprep.subr.mxu0 0.0
    %162 = vmatpush2.msra.mxu0 0.0
    %163 = vmatprep.subr.mxu0 0.0
    %164 = vmatpush2.msra.mxu0 0.0
    %165 = vmatprep.subr.mxu0 0.0
    %166 = vmatpush2.msra.mxu0 0.0
    %167 = vmatprep.subr.mxu0 0.0
    %168 = vmatpush2.msra.mxu0 0.0
    %169 = vmatprep.subr.mxu0 0.0
    %170 = vmatpush2.msra.mxu0 0.0
    %171 = vmatprep.subr.mxu0 0.0
    %172 = vmatpush2.msra.mxu0 0.0
    %173 = vmatprep.subr.mxu0 0.0
    %174 = vmatpush2.msra.mxu0 0.0
    %175 = vmatprep.mubr.f32.mxu0 0.0
    %176 = vmatmul.mubr.f32.gmra.mxu0 %v77
    %v177 = vpop.f32.mrf.mxu0
    %v178 = vadd.f32 0.0, %v177
    %v179 = vpop.f32.mrf.mxu0
    %v180 = vadd.f32 0.0, %v179
    %181 = vmatprep.mubr.f32.mxu0 0.0
    %182 = vmatmul.mubr.f32.gmra.mxu0 %v78
    %v183 = vpop.f32.mrf.mxu0
    %v184 = vadd.f32 0.0, %v183
    %v185 = vpop.f32.mrf.mxu0
    %v186 = vadd.f32 0.0, %v185
    %187 = vdwg.mxu0
    %v188 = vld [vmem:[#allocation6] sm:$0xff]
    %v189 = vld [vmem:[#allocation6 + $0x8] sm:$0xff]
    %v190 = vld [vmem:[#allocation6 + $0x10] sm:$0xff]
    %v191 = vld [vmem:[#allocation6 + $0x18] sm:$0xff]
    %v192 = vld [vmem:[#allocation6 + $0x20] sm:$0xff]
    %v193 = vld [vmem:[#allocation6 + $0x28] sm:$0xff]
    %v194 = vld [vmem:[#allocation6 + $0x30] sm:$0xff]
    %v195 = vld [vmem:[#allocation6 + $0x38] sm:$0xff]
    %v196 = vadd.s32 %v66, 128
    %vm197 = vcmp.lt.s32.totalorder %v66, 0
    %v198 = vsub.s32 0, %v66
    %v199 = vsel %vm197, %v198, %v66
    %v200 = vshrl.u32 %v199, 6
    %v201 = vand.u32 %v199, 63
    %v202 = vsub.s32 0, %v201
    %v203 = vsel %vm197, %v202, %v201
    %vm204 = vcmp.lt.s32.totalorder %v196, 0
    %v205 = vsub.s32 0, %v196
    %v206 = vsel %vm204, %v205, %v196
    %v207 = vshrl.u32 %v206, 6
    %v208 = vand.u32 %v206, 63
    %v209 = vsub.s32 0, %v208
    %v210 = vsel %vm204, %v209, %v208
    %vm211 = vcmp.ne.s32.totalorder %v203, 0
    %vm212 = vcmp.ne.s32.totalorder %v210, 0
    %vm213 = vcmp.lt.s32.totalorder %v203, 0
    %vm214 = vcmp.lt.s32.totalorder %v210, 0
    %vm215 = vmand %vm213, %vm211
    %vm216 = vmand %vm214, %vm212
    %v217 = vadd.s32 %v203, 64
    %v218 = vadd.s32 %v210, 64
    %v219 = vsel %vm215, %v217, %v203
    %v220 = vsel %vm216, %v218, %v210
    %vm221 = vcmp.lt.s32.totalorder %v219, 32
    %vm222 = vcmp.lt.s32.totalorder %v220, 32
    %v225 = vrot.slane %v184, 6
    %v226 = vrot.slane %v186, 6
    %v229 = vsel %vm221, %v178, %v225
    %v230 = vsel %vm222, %v180, %v226
    %v231 = vxor.u32 %v229, 2147483648
    %v232 = vxor.u32 %v230, 2147483648
    %v233 = vmul.f32 %v231, 1.442695
    %v234 = vpow.pop %v233
    %v235 = vmul.f32 %v232, 1.442695
    %v236 = vpow.pop %v235
    %v237 = vadd.f32 %v234, 1.0
    %v238 = vadd.f32 %v236, 1.0
    %v239 = vrcp.pop %v237
    %v240 = vmul.f32 1.0, %v239
    %v241 = vrcp.pop %v238
    %v242 = vmul.f32 1.0, %v241
    %v243 = vtanh.pop %v230
    %v244 = vmul.f32 %v240, 0.0
    %v245 = vmul.f32 %v240, %v243
    %247 = vrot.lane.b32.xlu0 %v245, 64
    %v248 = vpop.permute.xlu0 %247
    %v250 = vadd.f32 %v244, %v248
    %v251 = vtanh.pop %v250
    %v252 = vmul.f32 %v242, %v251
    %254 = vrot.lane.b32.xlu0 %v252, 64
    %v255 = vpop.permute.xlu0 %254
    %vm257 = vcmask 254976
    %258 = vst.msk [vmem:[#allocation2] sm:$0x3] %vm257, %v255
    %vm259 = vcmask 517376
    %260 = vst.msk [vmem:[#allocation2 + $0xe] sm:$0x3] %vm259, %v255
    %v261 = vrot.slane %v184, 2
    %v262 = vrot.slane %v186, 2
    %v265 = vsel %vm221, %v178, %v261
    %v266 = vsel %vm222, %v180, %v262
    %v267 = vpack.c.bf16 %v252, %v252
    %269 = vrot.lane.b32.xlu0 %v267, 64
    %v270 = vpop.permute.xlu0 %269
    %v279 = vunpack.c.l.b16 %v188
    %v280 = vunpack.c.h.b16 %v188
    %v281 = vunpack.c.l.b16 %v189
    %v282 = vunpack.c.h.b16 %v189
    %v283 = vunpack.c.l.b16 %v190
    %v284 = vunpack.c.h.b16 %v190
    %v285 = vunpack.c.l.b16 %v191
    %v286 = vunpack.c.h.b16 %v191
    %v287 = vunpack.c.l.b16 %v192
    %v288 = vunpack.c.h.b16 %v192
    %v289 = vunpack.c.l.b16 %v193
    %v290 = vunpack.c.h.b16 %v193
    %v291 = vunpack.c.l.b16 %v194
    %v292 = vunpack.c.h.b16 %v194
    %v293 = vunpack.c.l.b16 %v195
    %v294 = vunpack.c.h.b16 %v195
    %v295 = vpack.c.b16 %v281, %v279
    %v296 = vpack.c.b16 %v282, %v280
    %v297 = vpack.c.b16 %v285, %v283
    %v298 = vpack.c.b16 %v286, %v284
    %v299 = vpack.c.b16 %v289, %v287
    %v300 = vpack.c.b16 %v290, %v288
    %v301 = vpack.c.b16 %v293, %v291
    %v302 = vpack.c.b16 %v294, %v292
    %vm311 = vcmask 523264
    %v313 = vsel %vm311, %v270, 0
    %315 = vmatprep.subr.bf16.mxu0 0
    %316 = vmatpush1.bf16.msra.mxu0 0
    %317 = vmatprep.subr.bf16.mxu0 0
    %318 = vmatpush1.bf16.msra.mxu0 0
    %319 = vmatprep.subr.bf16.mxu0 0
    %320 = vmatpush1.bf16.msra.mxu0 0
    %321 = vmatprep.subr.bf16.mxu0 0
    %322 = vmatpush1.bf16.msra.mxu0 0
    %323 = vmatprep.subr.bf16.mxu0 %v302
    %324 = vmatpush1.bf16.msra.mxu0 %v301
    %325 = vmatprep.subr.bf16.mxu0 %v300
    %326 = vmatpush1.bf16.msra.mxu0 %v299
    %327 = vmatprep.subr.bf16.mxu0 %v298
    %328 = vmatpush1.bf16.msra.mxu0 %v297
    %329 = vmatprep.subr.bf16.mxu0 %v296
    %330 = vmatpush1.bf16.msra.mxu0 %v295
    %331 = vmatprep.subr.bf16.mxu0 0
    %332 = vmatpush2.bf16.msra.mxu0 0
    %333 = vmatprep.subr.bf16.mxu0 0
    %334 = vmatpush2.bf16.msra.mxu0 0
    %335 = vmatprep.subr.bf16.mxu0 0
    %336 = vmatpush2.bf16.msra.mxu0 0
    %337 = vmatprep.subr.bf16.mxu0 0
    %338 = vmatpush2.bf16.msra.mxu0 0
    %339 = vmatprep.subr.bf16.mxu0 0
    %340 = vmatpush2.bf16.msra.mxu0 0
    %341 = vmatprep.subr.bf16.mxu0 0
    %342 = vmatpush2.bf16.msra.mxu0 0
    %343 = vmatprep.subr.bf16.mxu0 0
    %344 = vmatpush2.bf16.msra.mxu0 0
    %345 = vmatprep.subr.bf16.mxu0 0
    %346 = vmatpush2.bf16.msra.mxu0 0
    %347 = vmatprep.mubr.bf16.mxu0 0
    %348 = vmatmul.mubr.bf16.gmra.mxu0 %v313
    %v349 = vpop.f32.mrf.mxu0
    %v350 = vadd.f32 0.0, %v349
    %v351 = vpop.f32.mrf.mxu0
    %v352 = vadd.f32 0.0, %v351
    %v353 = vpop.f32.mrf.mxu0
    %v354 = vpop.f32.mrf.mxu0
    %355 = vdwg.mxu0
    %v358 = vrot.slane %v350, 6
    %v359 = vrot.slane %v352, 6
    %v362 = vadd.f32 %v265, %v358
    %v363 = vadd.f32 %v266, %v359
    %v364 = vxor.u32 %v362, 2147483648
    %v365 = vxor.u32 %v363, 2147483648
    %v366 = vmul.f32 %v364, 1.442695
    %v367 = vpow.pop %v366
    %v368 = vmul.f32 %v365, 1.442695
    %v369 = vpow.pop %v368
    %v370 = vadd.f32 %v367, 1.0
    %v371 = vadd.f32 %v369, 1.0
    %v372 = vrcp.pop %v370
    %v373 = vmul.f32 1.0, %v372
    %v374 = vrcp.pop %v371
    %v375 = vmul.f32 1.0, %v374
    %v376 = vtanh.pop %v363
    %v378 = vrot.slane %v250, 6
    %v380 = vmul.f32 %v373, %v378
    %v381 = vmul.f32 %v373, %v376
    %383 = vrot.lane.b32.xlu0 %v381, 64
    %v384 = vpop.permute.xlu0 %383
    %v386 = vadd.f32 %v380, %v384
    %v387 = vtanh.pop %v386
    %v388 = vmul.f32 %v375, %v387
    %390 = vrot.lane.b32.xlu0 %v388, 64
    %v391 = vpop.permute.xlu0 %390
    %vm393 = vcmask 257026
    %394 = vst.msk [vmem:[#allocation2] sm:$0xc] %vm393, %v391
    %vm395 = vcmask 519426
    %396 = vst.msk [vmem:[#allocation2 + $0xa] sm:$0xc] %vm395, %v391
    %v397 = vpack.c.bf16 %v388, %v388
    %v399 = vrot.slane %v397, 1
    %400 = vrot.lane.b32.xlu0 %v399, 64
    %v401 = vpop.permute.xlu0 %400
    %v403 = vsel %vm311, %v401, 0
    %405 = vmatprep.subr.bf16.mxu0 0
    %406 = vmatpush1.bf16.msra.mxu0 0
    %407 = vmatprep.subr.bf16.mxu0 0
    %408 = vmatpush1.bf16.msra.mxu0 0
    %409 = vmatprep.subr.bf16.mxu0 0
    %410 = vmatpush1.bf16.msra.mxu0 0
    %411 = vmatprep.subr.bf16.mxu0 0
    %412 = vmatpush1.bf16.msra.mxu0 0
    %413 = vmatprep.subr.bf16.mxu0 %v302
    %414 = vmatpush1.bf16.msra.mxu0 %v301
    %415 = vmatprep.subr.bf16.mxu0 %v300
    %416 = vmatpush1.bf16.msra.mxu0 %v299
    %417 = vmatprep.subr.bf16.mxu0 %v298
    %418 = vmatpush1.bf16.msra.mxu0 %v297
    %419 = vmatprep.subr.bf16.mxu0 %v296
    %420 = vmatpush1.bf16.msra.mxu0 %v295
    %421 = vmatprep.subr.bf16.mxu0 0
    %422 = vmatpush2.bf16.msra.mxu0 0
    %423 = vmatprep.subr.bf16.mxu0 0
    %424 = vmatpush2.bf16.msra.mxu0 0
    %425 = vmatprep.subr.bf16.mxu0 0
    %426 = vmatpush2.bf16.msra.mxu0 0
    %427 = vmatprep.subr.bf16.mxu0 0
    %428 = vmatpush2.bf16.msra.mxu0 0
    %429 = vmatprep.subr.bf16.mxu0 0
    %430 = vmatpush2.bf16.msra.mxu0 0
    %431 = vmatprep.subr.bf16.mxu0 0
    %432 = vmatpush2.bf16.msra.mxu0 0
    %433 = vmatprep.subr.bf16.mxu0 0
    %434 = vmatpush2.bf16.msra.mxu0 0
    %435 = vmatprep.subr.bf16.mxu0 0
    %436 = vmatpush2.bf16.msra.mxu0 0
    %437 = vmatprep.mubr.bf16.mxu0 0
    %438 = vmatmul.mubr.bf16.gmra.mxu0 %v403
    %v439 = vpop.f32.mrf.mxu0
    %v440 = vadd.f32 0.0, %v439
    %v441 = vpop.f32.mrf.mxu0
    %v442 = vadd.f32 0.0, %v441
    %v443 = vpop.f32.mrf.mxu0
    %v444 = vpop.f32.mrf.mxu0
    %445 = vdwg.mxu0
    %v448 = vrot.slane %v440, 4
    %v449 = vrot.slane %v442, 4
    %v452 = vadd.f32 %v229, %v448
    %v453 = vadd.f32 %v230, %v449
    %v454 = vxor.u32 %v452, 2147483648
    %v455 = vxor.u32 %v453, 2147483648
    %v456 = vmul.f32 %v454, 1.442695
    %v457 = vpow.pop %v456
    %v458 = vmul.f32 %v455, 1.442695
    %v459 = vpow.pop %v458
    %v460 = vadd.f32 %v457, 1.0
    %v461 = vadd.f32 %v459, 1.0
    %v462 = vrcp.pop %v460
    %v463 = vmul.f32 1.0, %v462
    %v464 = vrcp.pop %v461
    %v465 = vmul.f32 1.0, %v464
    %v466 = vtanh.pop %v453
    %v468 = vrot.slane %v386, 6
    %v470 = vmul.f32 %v463, %v468
    %v471 = vmul.f32 %v463, %v466
    %473 = vrot.lane.b32.xlu0 %v471, 64
    %v474 = vpop.permute.xlu0 %473
    %v476 = vadd.f32 %v470, %v474
    %v477 = vtanh.pop %v476
    %v478 = vmul.f32 %v465, %v477
    %480 = vrot.lane.b32.xlu0 %v478, 64
    %v481 = vpop.permute.xlu0 %480
    %vm483 = vcmask 259076
    %484 = vst.msk [vmem:[#allocation2] sm:$0x30] %vm483, %v481
    %vm485 = vcmask 521476
    %486 = vst.msk [vmem:[#allocation2 + $0x6] sm:$0x30] %vm485, %v481
    %v487 = vpack.c.bf16 %v478, %v478
    %v489 = vrot.slane %v487, 2
    %490 = vrot.lane.b32.xlu0 %v489, 64
    %v491 = vpop.permute.xlu0 %490
    %v493 = vsel %vm311, %v491, 0
    %495 = vmatprep.subr.bf16.mxu0 0
    %496 = vmatpush1.bf16.msra.mxu0 0
    %497 = vmatprep.subr.bf16.mxu0 0
    %498 = vmatpush1.bf16.msra.mxu0 0
    %499 = vmatprep.subr.bf16.mxu0 0
    %500 = vmatpush1.bf16.msra.mxu0 0
    %501 = vmatprep.subr.bf16.mxu0 0
    %502 = vmatpush1.bf16.msra.mxu0 0
    %503 = vmatprep.subr.bf16.mxu0 %v302
    %504 = vmatpush1.bf16.msra.mxu0 %v301
    %505 = vmatprep.subr.bf16.mxu0 %v300
    %506 = vmatpush1.bf16.msra.mxu0 %v299
    %507 = vmatprep.subr.bf16.mxu0 %v298
    %508 = vmatpush1.bf16.msra.mxu0 %v297
    %509 = vmatprep.subr.bf16.mxu0 %v296
    %510 = vmatpush1.bf16.msra.mxu0 %v295
    %511 = vmatprep.subr.bf16.mxu0 0
    %512 = vmatpush2.bf16.msra.mxu0 0
    %513 = vmatprep.subr.bf16.mxu0 0
    %514 = vmatpush2.bf16.msra.mxu0 0
    %515 = vmatprep.subr.bf16.mxu0 0
    %516 = vmatpush2.bf16.msra.mxu0 0
    %517 = vmatprep.subr.bf16.mxu0 0
    %518 = vmatpush2.bf16.msra.mxu0 0
    %519 = vmatprep.subr.bf16.mxu0 0
    %520 = vmatpush2.bf16.msra.mxu0 0
    %521 = vmatprep.subr.bf16.mxu0 0
    %522 = vmatpush2.bf16.msra.mxu0 0
    %523 = vmatprep.subr.bf16.mxu0 0
    %524 = vmatpush2.bf16.msra.mxu0 0
    %525 = vmatprep.subr.bf16.mxu0 0
    %526 = vmatpush2.bf16.msra.mxu0 0
    %527 = vmatprep.mubr.bf16.mxu0 0
    %528 = vmatmul.mubr.bf16.gmra.mxu0 %v493
    %v529 = vpop.f32.mrf.mxu0
    %v530 = vadd.f32 0.0, %v529
    %v531 = vpop.f32.mrf.mxu0
    %v532 = vadd.f32 0.0, %v531
    %v533 = vpop.f32.mrf.mxu0
    %v534 = vpop.f32.mrf.mxu0
    %535 = vdwg.mxu0
    %v538 = vrot.slane %v530, 2
    %v539 = vrot.slane %v532, 2
    %v542 = vadd.f32 %v265, %v538
    %v543 = vadd.f32 %v266, %v539
    %v544 = vxor.u32 %v542, 2147483648
    %v545 = vxor.u32 %v543, 2147483648
    %v546 = vmul.f32 %v544, 1.442695
    %v547 = vpow.pop %v546
    %v548 = vmul.f32 %v545, 1.442695
    %v549 = vpow.pop %v548
    %v550 = vadd.f32 %v547, 1.0
    %v551 = vadd.f32 %v549, 1.0
    %v552 = vrcp.pop %v550
    %v553 = vmul.f32 1.0, %v552
    %v554 = vrcp.pop %v551
    %v555 = vmul.f32 1.0, %v554
    %v556 = vtanh.pop %v543
    %v558 = vrot.slane %v476, 6
    %v560 = vmul.f32 %v553, %v558
    %v561 = vmul.f32 %v553, %v556
    %563 = vrot.lane.b32.xlu0 %v561, 64
    %v564 = vpop.permute.xlu0 %563
    %v566 = vadd.f32 %v560, %v564
    %v567 = vtanh.pop %v566
    %v568 = vmul.f32 %v555, %v567
    %570 = vrot.lane.b32.xlu0 %v568, 64
    %v571 = vpop.permute.xlu0 %570
    %vm573 = vcmask 261126
    %574 = vst.msk [vmem:[#allocation2] sm:$0xc0] %vm573, %v571
    %vm575 = vcmask 523526
    %576 = vst.msk [vmem:[#allocation2 + $0x2] sm:$0xc0] %vm575, %v571
    %v579 = vrot.slane %v178, 6
    %v580 = vrot.slane %v180, 6
    %v583 = vsel %vm221, %v184, %v579
    %v584 = vsel %vm222, %v186, %v580
    %v585 = vpack.c.bf16 %v568, %v568
    %v587 = vrot.slane %v585, 3
    %588 = vrot.lane.b32.xlu0 %v587, 64
    %v589 = vpop.permute.xlu0 %588
    %v591 = vsel %vm311, %v589, 0
    %593 = vmatprep.subr.bf16.mxu0 0
    %594 = vmatpush1.bf16.msra.mxu0 0
    %595 = vmatprep.subr.bf16.mxu0 0
    %596 = vmatpush1.bf16.msra.mxu0 0
    %597 = vmatprep.subr.bf16.mxu0 0
    %598 = vmatpush1.bf16.msra.mxu0 0
    %599 = vmatprep.subr.bf16.mxu0 0
    %600 = vmatpush1.bf16.msra.mxu0 0
    %601 = vmatprep.subr.bf16.mxu0 %v302
    %602 = vmatpush1.bf16.msra.mxu0 %v301
    %603 = vmatprep.subr.bf16.mxu0 %v300
    %604 = vmatpush1.bf16.msra.mxu0 %v299
    %605 = vmatprep.subr.bf16.mxu0 %v298
    %606 = vmatpush1.bf16.msra.mxu0 %v297
    %607 = vmatprep.subr.bf16.mxu0 %v296
    %608 = vmatpush1.bf16.msra.mxu0 %v295
    %609 = vmatprep.subr.bf16.mxu0 0
    %610 = vmatpush2.bf16.msra.mxu0 0
    %611 = vmatprep.subr.bf16.mxu0 0
    %612 = vmatpush2.bf16.msra.mxu0 0
    %613 = vmatprep.subr.bf16.mxu0 0
    %614 = vmatpush2.bf16.msra.mxu0 0
    %615 = vmatprep.subr.bf16.mxu0 0
    %616 = vmatpush2.bf16.msra.mxu0 0
    %617 = vmatprep.subr.bf16.mxu0 0
    %618 = vmatpush2.bf16.msra.mxu0 0
    %619 = vmatprep.subr.bf16.mxu0 0
    %620 = vmatpush2.bf16.msra.mxu0 0
    %621 = vmatprep.subr.bf16.mxu0 0
    %622 = vmatpush2.bf16.msra.mxu0 0
    %623 = vmatprep.subr.bf16.mxu0 0
    %624 = vmatpush2.bf16.msra.mxu0 0
    %625 = vmatprep.mubr.bf16.mxu0 0
    %626 = vmatmul.mubr.bf16.gmra.mxu0 %v591
    %v627 = vpop.f32.mrf.mxu0
    %v628 = vadd.f32 0.0, %v627
    %v629 = vpop.f32.mrf.mxu0
    %v630 = vadd.f32 0.0, %v629
    %v631 = vpop.f32.mrf.mxu0
    %v632 = vpop.f32.mrf.mxu0
    %633 = vdwg.mxu0
    %v634 = vadd.f32 %v583, %v628
    %v635 = vadd.f32 %v584, %v630
    %v636 = vxor.u32 %v634, 2147483648
    %v637 = vxor.u32 %v635, 2147483648
    %v638 = vmul.f32 %v636, 1.442695
    %v639 = vpow.pop %v638
    %v640 = vmul.f32 %v637, 1.442695
    %v641 = vpow.pop %v640
    %v642 = vadd.f32 %v639, 1.0
    %v643 = vadd.f32 %v641, 1.0
    %v644 = vrcp.pop %v642
    %v645 = vmul.f32 1.0, %v644
    %v646 = vrcp.pop %v643
    %v647 = vmul.f32 1.0, %v646
    %v648 = vtanh.pop %v635
    %v650 = vrot.slane %v566, 6
    %v652 = vmul.f32 %v645, %v650
    %v653 = vmul.f32 %v645, %v648
    %655 = vrot.lane.b32.xlu0 %v653, 64
    %v656 = vpop.permute.xlu0 %655
    %v658 = vadd.f32 %v652, %v656
    %v659 = vtanh.pop %v658
    %v660 = vmul.f32 %v647, %v659
    %662 = vrot.lane.b32.xlu0 %v660, 64
    %v663 = vpop.permute.xlu0 %662
    %665 = vst.msk [vmem:[#allocation2 + $0x8] sm:$0x3] %vm257, %v663
    %666 = vst.msk [vmem:[#allocation2 + $0x6] sm:$0x3] %vm259, %v663
    %v667 = vrot.slane %v178, 2
    %v668 = vrot.slane %v180, 2
    %v671 = vsel %vm221, %v184, %v667
    %v672 = vsel %vm222, %v186, %v668
    %v673 = vpack.c.bf16 %v660, %v660
    %675 = vrot.lane.b32.xlu0 %v673, 64
    %v676 = vpop.permute.xlu0 %675
    %v678 = vsel %vm311, %v676, 0
    %680 = vmatprep.subr.bf16.mxu0 0
    %681 = vmatpush1.bf16.msra.mxu0 0
    %682 = vmatprep.subr.bf16.mxu0 0
    %683 = vmatpush1.bf16.msra.mxu0 0
    %684 = vmatprep.subr.bf16.mxu0 0
    %685 = vmatpush1.bf16.msra.mxu0 0
    %686 = vmatprep.subr.bf16.mxu0 0
    %687 = vmatpush1.bf16.msra.mxu0 0
    %688 = vmatprep.subr.bf16.mxu0 %v302
    %689 = vmatpush1.bf16.msra.mxu0 %v301
    %690 = vmatprep.subr.bf16.mxu0 %v300
    %691 = vmatpush1.bf16.msra.mxu0 %v299
    %692 = vmatprep.subr.bf16.mxu0 %v298
    %693 = vmatpush1.bf16.msra.mxu0 %v297
    %694 = vmatprep.subr.bf16.mxu0 %v296
    %695 = vmatpush1.bf16.msra.mxu0 %v295
    %696 = vmatprep.subr.bf16.mxu0 0
    %697 = vmatpush2.bf16.msra.mxu0 0
    %698 = vmatprep.subr.bf16.mxu0 0
    %699 = vmatpush2.bf16.msra.mxu0 0
    %700 = vmatprep.subr.bf16.mxu0 0
    %701 = vmatpush2.bf16.msra.mxu0 0
    %702 = vmatprep.subr.bf16.mxu0 0
    %703 = vmatpush2.bf16.msra.mxu0 0
    %704 = vmatprep.subr.bf16.mxu0 0
    %705 = vmatpush2.bf16.msra.mxu0 0
    %706 = vmatprep.subr.bf16.mxu0 0
    %707 = vmatpush2.bf16.msra.mxu0 0
    %708 = vmatprep.subr.bf16.mxu0 0
    %709 = vmatpush2.bf16.msra.mxu0 0
    %710 = vmatprep.subr.bf16.mxu0 0
    %711 = vmatpush2.bf16.msra.mxu0 0
    %712 = vmatprep.mubr.bf16.mxu0 0
    %713 = vmatmul.mubr.bf16.gmra.mxu0 %v678
    %v714 = vpop.f32.mrf.mxu0
    %v715 = vadd.f32 0.0, %v714
    %v716 = vpop.f32.mrf.mxu0
    %v717 = vadd.f32 0.0, %v716
    %v718 = vpop.f32.mrf.mxu0
    %v719 = vpop.f32.mrf.mxu0
    %720 = vdwg.mxu0
    %v723 = vrot.slane %v715, 6
    %v724 = vrot.slane %v717, 6
    %v727 = vadd.f32 %v671, %v723
    %v728 = vadd.f32 %v672, %v724
    %v729 = vxor.u32 %v727, 2147483648
    %v730 = vxor.u32 %v728, 2147483648
    %v731 = vmul.f32 %v729, 1.442695
    %v732 = vpow.pop %v731
    %v733 = vmul.f32 %v730, 1.442695
    %v734 = vpow.pop %v733
    %v735 = vadd.f32 %v732, 1.0
    %v736 = vadd.f32 %v734, 1.0
    %v737 = vrcp.pop %v735
    %v738 = vmul.f32 1.0, %v737
    %v739 = vrcp.pop %v736
    %v740 = vmul.f32 1.0, %v739
    %v741 = vtanh.pop %v728
    %v743 = vrot.slane %v658, 6
    %v745 = vmul.f32 %v738, %v743
    %v746 = vmul.f32 %v738, %v741
    %748 = vrot.lane.b32.xlu0 %v746, 64
    %v749 = vpop.permute.xlu0 %748
    %v751 = vadd.f32 %v745, %v749
    %v752 = vtanh.pop %v751
    %v753 = vmul.f32 %v740, %v752
    %755 = vrot.lane.b32.xlu0 %v753, 64
    %v756 = vpop.permute.xlu0 %755
    %758 = vst.msk [vmem:[#allocation2 + $0x8] sm:$0xc] %vm393, %v756
    %759 = vst.msk [vmem:[#allocation2 + $0x2] sm:$0xc] %vm395, %v756
    %v760 = vpack.c.bf16 %v753, %v753
    %v762 = vrot.slane %v760, 1
    %763 = vrot.lane.b32.xlu0 %v762, 64
    %v764 = vpop.permute.xlu0 %763
    %v766 = vsel %vm311, %v764, 0
    %768 = vmatprep.subr.bf16.mxu0 0
    %769 = vmatpush1.bf16.msra.mxu0 0
    %770 = vmatprep.subr.bf16.mxu0 0
    %771 = vmatpush1.bf16.msra.mxu0 0
    %772 = vmatprep.subr.bf16.mxu0 0
    %773 = vmatpush1.bf16.msra.mxu0 0
    %774 = vmatprep.subr.bf16.mxu0 0
    %775 = vmatpush1.bf16.msra.mxu0 0
    %776 = vmatprep.subr.bf16.mxu0 %v302
    %777 = vmatpush1.bf16.msra.mxu0 %v301
    %778 = vmatprep.subr.bf16.mxu0 %v300
    %779 = vmatpush1.bf16.msra.mxu0 %v299
    %780 = vmatprep.subr.bf16.mxu0 %v298
    %781 = vmatpush1.bf16.msra.mxu0 %v297
    %782 = vmatprep.subr.bf16.mxu0 %v296
    %783 = vmatpush1.bf16.msra.mxu0 %v295
    %784 = vmatprep.subr.bf16.mxu0 0
    %785 = vmatpush2.bf16.msra.mxu0 0
    %786 = vmatprep.subr.bf16.mxu0 0
    %787 = vmatpush2.bf16.msra.mxu0 0
    %788 = vmatprep.subr.bf16.mxu0 0
    %789 = vmatpush2.bf16.msra.mxu0 0
    %790 = vmatprep.subr.bf16.mxu0 0
    %791 = vmatpush2.bf16.msra.mxu0 0
    %792 = vmatprep.subr.bf16.mxu0 0
    %793 = vmatpush2.bf16.msra.mxu0 0
    %794 = vmatprep.subr.bf16.mxu0 0
    %795 = vmatpush2.bf16.msra.mxu0 0
    %796 = vmatprep.subr.bf16.mxu0 0
    %797 = vmatpush2.bf16.msra.mxu0 0
    %798 = vmatprep.subr.bf16.mxu0 0
    %799 = vmatpush2.bf16.msra.mxu0 0
    %800 = vmatprep.mubr.bf16.mxu0 0
    %801 = vmatmul.mubr.bf16.gmra.mxu0 %v766
    %v802 = vpop.f32.mrf.mxu0
    %v803 = vadd.f32 0.0, %v802
    %v804 = vpop.f32.mrf.mxu0
    %v805 = vadd.f32 0.0, %v804
    %v806 = vpop.f32.mrf.mxu0
    %v807 = vpop.f32.mrf.mxu0
    %808 = vdwg.mxu0
    %v811 = vrot.slane %v803, 4
    %v812 = vrot.slane %v805, 4
    %v815 = vadd.f32 %v583, %v811
    %v816 = vadd.f32 %v584, %v812
    %v817 = vxor.u32 %v815, 2147483648
    %v818 = vxor.u32 %v816, 2147483648
    %v819 = vmul.f32 %v817, 1.442695
    %v820 = vpow.pop %v819
    %v821 = vmul.f32 %v818, 1.442695
    %v822 = vpow.pop %v821
    %v823 = vadd.f32 %v820, 1.0
    %v824 = vadd.f32 %v822, 1.0
    %v825 = vrcp.pop %v823
    %v826 = vmul.f32 1.0, %v825
    %v827 = vrcp.pop %v824
    %v828 = vmul.f32 1.0, %v827
    %v829 = vtanh.pop %v816
    %v831 = vrot.slane %v751, 6
    %v833 = vmul.f32 %v826, %v831
    %v834 = vmul.f32 %v826, %v829
    %836 = vrot.lane.b32.xlu0 %v834, 64
    %v837 = vpop.permute.xlu0 %836
    %v839 = vadd.f32 %v833, %v837
    %v840 = vtanh.pop %v839
    %v841 = vmul.f32 %v828, %v840
    %843 = vrot.lane.b32.xlu0 %v841, 64
    %v844 = vpop.permute.xlu0 %843
    %846 = vst.msk [vmem:[#allocation2 + $0x8] sm:$0x30] %vm483, %v844
    %847 = vst.msk [vmem:[#allocation2 - $0x2] sm:$0x30] %vm485, %v844
    %v848 = vpack.c.bf16 %v841, %v841
    %v850 = vrot.slane %v848, 2
    %851 = vrot.lane.b32.xlu0 %v850, 64
    %v852 = vpop.permute.xlu0 %851
    %v854 = vsel %vm311, %v852, 0
    %856 = vmatprep.subr.bf16.mxu0 0
    %857 = vmatpush1.bf16.msra.mxu0 0
    %858 = vmatprep.subr.bf16.mxu0 0
    %859 = vmatpush1.bf16.msra.mxu0 0
    %860 = vmatprep.subr.bf16.mxu0 0
    %861 = vmatpush1.bf16.msra.mxu0 0
    %862 = vmatprep.subr.bf16.mxu0 0
    %863 = vmatpush1.bf16.msra.mxu0 0
    %864 = vmatprep.subr.bf16.mxu0 %v302
    %865 = vmatpush1.bf16.msra.mxu0 %v301
    %866 = vmatprep.subr.bf16.mxu0 %v300
    %867 = vmatpush1.bf16.msra.mxu0 %v299
    %868 = vmatprep.subr.bf16.mxu0 %v298
    %869 = vmatpush1.bf16.msra.mxu0 %v297
    %870 = vmatprep.subr.bf16.mxu0 %v296
    %871 = vmatpush1.bf16.msra.mxu0 %v295
    %872 = vmatprep.subr.bf16.mxu0 0
    %873 = vmatpush2.bf16.msra.mxu0 0
    %874 = vmatprep.subr.bf16.mxu0 0
    %875 = vmatpush2.bf16.msra.mxu0 0
    %876 = vmatprep.subr.bf16.mxu0 0
    %877 = vmatpush2.bf16.msra.mxu0 0
    %878 = vmatprep.subr.bf16.mxu0 0
    %879 = vmatpush2.bf16.msra.mxu0 0
    %880 = vmatprep.subr.bf16.mxu0 0
    %881 = vmatpush2.bf16.msra.mxu0 0
    %882 = vmatprep.subr.bf16.mxu0 0
    %883 = vmatpush2.bf16.msra.mxu0 0
    %884 = vmatprep.subr.bf16.mxu0 0
    %885 = vmatpush2.bf16.msra.mxu0 0
    %886 = vmatprep.subr.bf16.mxu0 0
    %887 = vmatpush2.bf16.msra.mxu0 0
    %888 = vmatprep.mubr.bf16.mxu0 0
    %889 = vmatmul.mubr.bf16.gmra.mxu0 %v854
    %v890 = vpop.f32.mrf.mxu0
    %v891 = vadd.f32 0.0, %v890
    %v892 = vpop.f32.mrf.mxu0
    %v893 = vadd.f32 0.0, %v892
    %v894 = vpop.f32.mrf.mxu0
    %v895 = vpop.f32.mrf.mxu0
    %896 = vdwg.mxu0
    %v899 = vrot.slane %v891, 2
    %v900 = vrot.slane %v893, 2
    %v903 = vadd.f32 %v671, %v899
    %v904 = vadd.f32 %v672, %v900
    %v905 = vxor.u32 %v903, 2147483648
    %v906 = vxor.u32 %v904, 2147483648
    %v907 = vmul.f32 %v905, 1.442695
    %v908 = vpow.pop %v907
    %v909 = vmul.f32 %v906, 1.442695
    %v910 = vpow.pop %v909
    %v911 = vadd.f32 %v908, 1.0
    %v912 = vadd.f32 %v910, 1.0
    %v913 = vrcp.pop %v911
    %v914 = vmul.f32 1.0, %v913
    %v915 = vrcp.pop %v912
    %v916 = vmul.f32 1.0, %v915
    %v917 = vtanh.pop %v904
    %v919 = vrot.slane %v839, 6
    %v921 = vmul.f32 %v914, %v919
    %v922 = vmul.f32 %v914, %v917
    %924 = vrot.lane.b32.xlu0 %v922, 64
    %v925 = vpop.permute.xlu0 %924
    %v927 = vadd.f32 %v921, %v925
    %v928 = vtanh.pop %v927
    %v929 = vmul.f32 %v916, %v928
    %931 = vrot.lane.b32.xlu0 %v929, 64
    %v932 = vpop.permute.xlu0 %931
    %934 = vst.msk [vmem:[#allocation2 + $0x8] sm:$0xc0] %vm573, %v932
    %935 = vst.msk [vmem:[#allocation2 - $0x6] sm:$0xc0] %vm575, %v932
    %v936 = vld [vmem:[#allocation2] sm:$0xff]
    %v937 = vld [vmem:[#allocation2 + $0x8] sm:$0xff]
    %v938 = vmax.f32 %v936, 0.0
    %v939 = vmax.f32 %v937, 0.0
    %v940 = vpack.c.bf16 %v939, %v938
    %v941 = vld [vmem:[#allocation8] sm:$0xf]
    %v942 = vld [vmem:[#allocation8 + $0x4] sm:$0xf]
    %v943 = vld [vmem:[#allocation8 + $0x8] sm:$0xf]
    %v944 = vld [vmem:[#allocation8 + $0xc] sm:$0xf]
    %v945 = vld [vmem:[#allocation8 + $0x10] sm:$0xf]
    %v946 = vld [vmem:[#allocation8 + $0x14] sm:$0xf]
    %v947 = vld [vmem:[#allocation8 + $0x18] sm:$0xf]
    %v948 = vld [vmem:[#allocation8 + $0x1c] sm:$0xf]
    %v949 = vld [vmem:[%s4] sm:$0x1]
    %v951 = vlaneseq
    %v952 = vshrl.u32 %v951, 7
    %v953 = vsub.s32 0, %v952
    %v954 = vrot.slane %v949, %v953
    %v964 = vunpack.c.l.b16 %v941
    %v965 = vunpack.c.l.b16 %v942
    %v966 = vunpack.c.l.b16 %v943
    %v967 = vunpack.c.l.b16 %v944
    %v968 = vunpack.c.l.b16 %v945
    %v969 = vunpack.c.l.b16 %v946
    %v970 = vunpack.c.l.b16 %v947
    %v971 = vunpack.c.l.b16 %v948
    %v972 = vpack.c.b16 %v965, %v964
    %v973 = vpack.c.b16 %v967, %v966
    %v974 = vpack.c.b16 %v969, %v968
    %v975 = vpack.c.b16 %v971, %v970
    %v981 = vsel %vm311, %v940, 0
    %983 = vmatprep.subr.bf16.mxu0 0
    %984 = vmatpush1.bf16.msra.mxu0 0
    %985 = vmatprep.subr.bf16.mxu0 0
    %986 = vmatpush1.bf16.msra.mxu0 0
    %987 = vmatprep.subr.bf16.mxu0 0
    %988 = vmatpush1.bf16.msra.mxu0 0
    %989 = vmatprep.subr.bf16.mxu0 0
    %990 = vmatpush1.bf16.msra.mxu0 0
    %991 = vmatprep.subr.bf16.mxu0 0
    %992 = vmatpush1.bf16.msra.mxu0 %v975
    %993 = vmatprep.subr.bf16.mxu0 0
    %994 = vmatpush1.bf16.msra.mxu0 %v974
    %995 = vmatprep.subr.bf16.mxu0 0
    %996 = vmatpush1.bf16.msra.mxu0 %v973
    %997 = vmatprep.subr.bf16.mxu0 0
    %998 = vmatpush1.bf16.msra.mxu0 %v972
    %999 = vmatprep.subr.bf16.mxu0 0
    %1000 = vmatpush2.bf16.msra.mxu0 0
    %1001 = vmatprep.subr.bf16.mxu0 0
    %1002 = vmatpush2.bf16.msra.mxu0 0
    %1003 = vmatprep.subr.bf16.mxu0 0
    %1004 = vmatpush2.bf16.msra.mxu0 0
    %1005 = vmatprep.subr.bf16.mxu0 0
    %1006 = vmatpush2.bf16.msra.mxu0 0
    %1007 = vmatprep.subr.bf16.mxu0 0
    %1008 = vmatpush2.bf16.msra.mxu0 0
    %1009 = vmatprep.subr.bf16.mxu0 0
    %1010 = vmatpush2.bf16.msra.mxu0 0
    %1011 = vmatprep.subr.bf16.mxu0 0
    %1012 = vmatpush2.bf16.msra.mxu0 0
    %1013 = vmatprep.subr.bf16.mxu0 0
    %1014 = vmatpush2.bf16.msra.mxu0 0
    %1015 = vmatprep.mubr.bf16.mxu0 0
    %1016 = vmatmul.mubr.bf16.gmra.mxu0 %v981
    %v1017 = vpop.f32.mrf.mxu0
    %v1018 = vadd.f32 %v954, %v1017
    %v1019 = vpop.f32.mrf.mxu0
    %v1020 = vpop.f32.mrf.mxu0
    %v1021 = vadd.f32 %v954, %v1020
    %v1022 = vpop.f32.mrf.mxu0
    %1023 = vdwg.mxu0
    %1024 = vmax.xlane.f32.xlu0 %v1018
    %v1025 = vpop.xlane.xlu0 %1024
    %1026 = vmax.xlane.f32.xlu0 %v1021
    %v1027 = vpop.xlane.xlu0 %1026
    %v1028 = vsub.f32 %v1018, %v1025
    %v1029 = vsub.f32 %v1021, %v1027
    %v1030 = vmul.f32 %v1028, 1.442695
    %v1031 = vpow.pop %v1030
    %v1032 = vmul.f32 %v1029, 1.442695
    %v1033 = vpow.pop %v1032
    %1034 = vadd.xlane.f32.xlu0 %v1031
    %v1035 = vpop.xlane.xlu0 %1034
    %1036 = vadd.xlane.f32.xlu0 %v1033
    %v1037 = vpop.xlane.xlu0 %1036
    %v1038 = vlog2.pop %v1035
    %v1039 = vmul.f32 %v1038, 0.6931472
    %v1040 = vlog2.pop %v1037
    %v1041 = vmul.f32 %v1040, 0.6931472
    %v1042 = vadd.f32 %v1025, %v1039
    %v1043 = vadd.f32 %v1027, %v1041
    %v1044 = vsub.f32 %v1018, %v1042
    %v1045 = vsub.f32 %v1021, %v1043
    %1046 = vst [vmem:[#allocation9] sm:$0xff] %v1044
    %1047 = vst [vmem:[#allocation9 + $0x8] sm:$0xff] %v1045
    // Predicated region
    $region34: #{tpu_custom_call.1} parent=1 // pred_check
      _
    $region35: #{tpu_custom_call.1} parent=1 // pred_check_branch
      %1049 = sbr.rel (0) target = $region37
    $region36: #{tpu_custom_call.1} parent=1 // pred_region
      %s1051 = ssub.s32 256, 256
      %1052 = vsyncadd [#allocation5], %s1051
      %s1053 = sshll.u32 [#allocation9], 4
      %s1054 = int_to_ptr.vmem [resolvable:$true] %s1053
      %1059 = dma.vmem_to_hbm [thread:$0]  %s1054, 256, %s5, [#allocation5], 128, 128, 8
    $region37: #{tpu_custom_call.1} parent=1 // pred_fallthru
      _
    // Predicated region
    $region38: #{tpu_custom_call.1} parent=1 // pred_check
      _
    $region39: #{tpu_custom_call.1} parent=1 // pred_check_branch
      %1061 = sbr.rel (0) target = $region41
    $region40: #{tpu_custom_call.1} parent=1 // pred_region
      %1062 = dma.done [#allocation5], 256
    $region41: #{tpu_custom_call.1} parent=1 // pred_fallthru
      _
    %1063 = vsyncpa [#allocation4], 1
    %1064 = vsyncpa [#allocation7], 1
    %1065 = vsyncpa [#allocation5], 1

</llo_original>
